<compile_context>
chip_gen: v7x
topology: tpu7x:2x2x1
jax: 0.10.0
libtpu: 0.0.40
codegen_flags: <defaults>
</compile_context>

<pallas_src>
import math
from functools import partial

import jax
import jax.numpy as jnp
from jax.experimental import pallas as pl
from jax.experimental.pallas import tpu as pltpu


def _mha_kernel(q_ref, k_ref, v_ref, mask_ref,
                wq_ref, bq_ref, wk_ref, bk_ref, wv_ref, bv_ref,
                wo_ref, bo_ref, out_ref, *, h, d_k):
    q_in = q_ref[0]            # (S, d_model)
    k_in = k_ref[0]
    v_in = v_ref[0]

    # Full-width input projections: one MXU matmul each, K = N = d_model.
    q = jnp.dot(q_in, wq_ref[...], preferred_element_type=jnp.float32) + bq_ref[...]
    k = jnp.dot(k_in, wk_ref[...], preferred_element_type=jnp.float32) + bk_ref[...]
    v = jnp.dot(v_in, wv_ref[...], preferred_element_type=jnp.float32) + bv_ref[...]

    masked = mask_ref[0] != 0                    # (S, S) bool, True = masked
    scale = jnp.float32(1.0 / math.sqrt(d_k))

    # Per-head scaled dot-product attention (heads statically unrolled;
    # all slices are static lane slices of in-register/VMEM values).
    ctx_heads = []
    for hh in range(h):
        lo = hh * d_k
        qh = q[:, lo:lo + d_k]                   # (S, d_k)
        kh = k[:, lo:lo + d_k]
        vh = v[:, lo:lo + d_k]

        # q @ k^T without materializing a transpose: contract last dims.
        scores = jax.lax.dot_general(
            qh, kh, dimension_numbers=(((1,), (1,)), ((), ())),
            preferred_element_type=jnp.float32) * scale       # (S, S)
        scores = jnp.where(masked, jnp.float32(-1e9), scores)

        m = jnp.max(scores, axis=-1, keepdims=True)
        e = jnp.exp(scores - m)
        denom = jnp.sum(e, axis=-1, keepdims=True)
        p_attn = e * pl.reciprocal(denom, approx=True)
        # TODO(synk): p_attn (self.attn) is stored on the module in PyTorch but
        # never returned by forward; we do not emit it as an output here.

        ctx_heads.append(jnp.dot(p_attn, vh, preferred_element_type=jnp.float32))

    # Lane-dense (S, d_model) context slab -> single full-width output linear.
    ctx = jnp.concatenate(ctx_heads, axis=-1)                  # (S, d_model)
    out = jnp.dot(ctx, wo_ref[...], preferred_element_type=jnp.float32) + bo_ref[...]
    out_ref[0] = out.astype(out_ref.dtype)


def multi_headed_attention(query, key, value, mask, params, h):
    """Pallas forward pass equivalent to MultiHeadedAttention(h, d_model), dropout p=0."""
    wq, bq, wk, bk, wv, bv, wo, bo = params
    B, S, d_model = query.shape
    assert d_model % h == 0
    d_k = d_model // h

    # Biases as (1, d_model) rows (layout plumbing only; no weight reshapes).
    bq_r = bq.reshape(1, d_model)
    bk_r = bk.reshape(1, d_model)
    bv_r = bv.reshape(1, d_model)
    bo_r = bo.reshape(1, d_model)

    # Compact int8 mask (True = masked); zeros if no mask was given.
    if mask is None:
        mask_i8 = jnp.zeros((B, S, S), jnp.int8)
    else:
        mask_i8 = mask.astype(jnp.int8)

    kernel = partial(_mha_kernel, h=h, d_k=d_k)

    # Weight / bias index_maps are batch-independent -> DMA'd once, resident.
    w_spec = pl.BlockSpec((d_model, d_model), lambda b: (0, 0))
    b_spec = pl.BlockSpec((1, d_model), lambda b: (0, 0))

    out = pl.pallas_call(
        kernel,
        out_shape=jax.ShapeDtypeStruct((B, S, d_model), query.dtype),
        grid_spec=pltpu.PrefetchScalarGridSpec(
            num_scalar_prefetch=0,
            grid=(B,),
            in_specs=[
                pl.BlockSpec((1, S, d_model), lambda b: (b, 0, 0)),   # query
                pl.BlockSpec((1, S, d_model), lambda b: (b, 0, 0)),   # key
                pl.BlockSpec((1, S, d_model), lambda b: (b, 0, 0)),   # value
                pl.BlockSpec((1, S, S), lambda b: (b, 0, 0)),         # mask (int8)
                w_spec, b_spec,                                       # Wq, bq
                w_spec, b_spec,                                       # Wk, bk
                w_spec, b_spec,                                       # Wv, bv
                w_spec, b_spec,                                       # Wo, bo
            ],
            out_specs=pl.BlockSpec((1, S, d_model), lambda b: (b, 0, 0)),
        ),
        compiler_params=pltpu.CompilerParams(
            dimension_semantics=("parallel",)),
    )(query, key, value, mask_i8,
      wq, bq_r, wk, bk_r, wv, bv_r, wo, bo_r)
    return out


def reference_mha(query, key, value, mask, params, h):
    """Plain-JAX reference matching the PyTorch forward (dropout p=0)."""
    wq, bq, wk, bk, wv, bv, wo, bo = params
    B, S, d_model = query.shape
    d_k = d_model // h

    def lin(x, w, b):
        return x @ w + b

    q = lin(query, wq, bq).reshape(B, S, h, d_k).transpose(0, 2, 1, 3)
    k = lin(key, wk, bk).reshape(B, S, h, d_k).transpose(0, 2, 1, 3)
    v = lin(value, wv, bv).reshape(B, S, h, d_k).transpose(0, 2, 1, 3)

    scores = jnp.einsum('bhqd,bhkd->bhqk', q, k) / math.sqrt(d_k)
    if mask is not None:
        scores = jnp.where(mask[:, None, :, :], -1e9, scores)
    p = jax.nn.softmax(scores, axis=-1)
    ctx = jnp.einsum('bhqk,bhkd->bhqd', p, v)
    ctx = ctx.transpose(0, 2, 1, 3).reshape(B, S, d_model)
    return ctx @ wo + bo


if __name__ == "__main__":
    B, S, h, d_model = 2, 8, 4, 32
    key0 = jax.random.PRNGKey(0)
    keys = jax.random.split(key0, 12)

    # Deterministic synthetic parameters (nn.Linear(d_model, d_model) x 4):
    # weights stored in (in_features, out_features) layout so y = x @ W + b.
    def init_w(k):
        return jax.random.normal(k, (d_model, d_model), jnp.float32) * 0.1

    def init_b(k):
        return jax.random.normal(k, (d_model,), jnp.float32) * 0.01

    params = (init_w(keys[0]), init_b(keys[1]),   # Wq, bq
              init_w(keys[2]), init_b(keys[3]),   # Wk, bk
              init_w(keys[4]), init_b(keys[5]),   # Wv, bv
              init_w(keys[6]), init_b(keys[7]))   # Wo, bo

    query = jax.random.normal(keys[8], (B, S, d_model), jnp.float32)
    key_in = jax.random.normal(keys[9], (B, S, d_model), jnp.float32)
    value = jax.random.normal(keys[10], (B, S, d_model), jnp.float32)
    mask = jax.random.uniform(keys[11], (B, S, S)) < 0.25   # bool, True = masked

    out = multi_headed_attention(query, key_in, value, mask, params, h)
    out = jax.block_until_ready(out)

    ref = reference_mha(query, key_in, value, mask, params, h)
    assert out.shape == (B, S, d_model)
    # Tolerance covers the approximate (EUP) reciprocal in the softmax divide.
    assert jnp.allclose(out, ref, atol=2e-3, rtol=2e-3), (
        f"max abs err {jnp.max(jnp.abs(out - ref))}")

    print("KERNEL_OK")
</pallas_src>

<mosaic_0001>
module attributes {stable_mosaic.version = 11 : i64} {
  func.func @_mha_kernel(%arg0: i32, %arg1: memref<1x8x32xf32, #tpu.memory_space<vmem>>, %arg2: memref<1x8x32xf32, #tpu.memory_space<vmem>>, %arg3: memref<1x8x32xf32, #tpu.memory_space<vmem>>, %arg4: memref<1x8x8xi8, #tpu.memory_space<vmem>>, %arg5: memref<32x32xf32, #tpu.memory_space<vmem>>, %arg6: memref<1x32xf32, #tpu.memory_space<vmem>>, %arg7: memref<32x32xf32, #tpu.memory_space<vmem>>, %arg8: memref<1x32xf32, #tpu.memory_space<vmem>>, %arg9: memref<32x32xf32, #tpu.memory_space<vmem>>, %arg10: memref<1x32xf32, #tpu.memory_space<vmem>>, %arg11: memref<32x32xf32, #tpu.memory_space<vmem>>, %arg12: memref<1x32xf32, #tpu.memory_space<vmem>>, %arg13: memref<1x8x32xf32, #tpu.memory_space<vmem>>) attributes {dimension_semantics = [#tpu.dimension_semantics<parallel>], iteration_bounds = array<i64: 2>, scalar_prefetch = 0 : i64, scratch_operands = 0 : i64, tpu.core_type = #tpu.core_type<tc>, window_params = [{transform_indices = @transform_0, window_bounds = array<i64: 1, 8, 32>}, {transform_indices = @transform_1, window_bounds = array<i64: 1, 8, 32>}, {transform_indices = @transform_2, window_bounds = array<i64: 1, 8, 32>}, {transform_indices = @transform_3, window_bounds = array<i64: 1, 8, 8>}, {pipeline_mode = #tpu.pipeline_mode<synchronous>, transform_indices = @transform_4, window_bounds = array<i64: 32, 32>}, {pipeline_mode = #tpu.pipeline_mode<synchronous>, transform_indices = @transform_5, window_bounds = array<i64: 1, 32>}, {pipeline_mode = #tpu.pipeline_mode<synchronous>, transform_indices = @transform_6, window_bounds = array<i64: 32, 32>}, {pipeline_mode = #tpu.pipeline_mode<synchronous>, transform_indices = @transform_7, window_bounds = array<i64: 1, 32>}, {pipeline_mode = #tpu.pipeline_mode<synchronous>, transform_indices = @transform_8, window_bounds = array<i64: 32, 32>}, {pipeline_mode = #tpu.pipeline_mode<synchronous>, transform_indices = @transform_9, window_bounds = array<i64: 1, 32>}, {pipeline_mode = #tpu.pipeline_mode<synchronous>, transform_indices = @transform_10, window_bounds = array<i64: 32, 32>}, {pipeline_mode = #tpu.pipeline_mode<synchronous>, transform_indices = @transform_11, window_bounds = array<i64: 1, 32>}, {transform_indices = @transform_12, window_bounds = array<i64: 1, 8, 32>}]} {
    %c0 = arith.constant 0 : index
    %c0_0 = arith.constant 0 : index
    %c0_1 = arith.constant 0 : index
    %0 = vector.load %arg1[%c0, %c0_0, %c0_1] : memref<1x8x32xf32, #tpu.memory_space<vmem>>, vector<1x8x32xf32>
    %1 = vector.shape_cast %0 : vector<1x8x32xf32> to vector<8x32xf32>
    %c0_2 = arith.constant 0 : index
    %c0_3 = arith.constant 0 : index
    %c0_4 = arith.constant 0 : index
    %2 = vector.load %arg2[%c0_2, %c0_3, %c0_4] : memref<1x8x32xf32, #tpu.memory_space<vmem>>, vector<1x8x32xf32>
    %3 = vector.shape_cast %2 : vector<1x8x32xf32> to vector<8x32xf32>
    %c0_5 = arith.constant 0 : index
    %c0_6 = arith.constant 0 : index
    %c0_7 = arith.constant 0 : index
    %4 = vector.load %arg3[%c0_5, %c0_6, %c0_7] : memref<1x8x32xf32, #tpu.memory_space<vmem>>, vector<1x8x32xf32>
    %5 = vector.shape_cast %4 : vector<1x8x32xf32> to vector<8x32xf32>
    %c0_8 = arith.constant 0 : index
    %c0_9 = arith.constant 0 : index
    %6 = vector.load %arg5[%c0_8, %c0_9] : memref<32x32xf32, #tpu.memory_space<vmem>>, vector<32x32xf32>
    %cst = arith.constant dense<0.000000e+00> : vector<8x32xf32>
    %7 = tpu.matmul %1, %6, %cst {dimension_numbers = #tpu.dot_dimension_numbers<[1], [0], [0], [1], [0, 0, 1, 1], [], []>} : vector<8x32xf32>, vector<32x32xf32>, vector<8x32xf32> -> vector<8x32xf32>
    %c0_10 = arith.constant 0 : index
    %c0_11 = arith.constant 0 : index
    %8 = vector.load %arg6[%c0_10, %c0_11] : memref<1x32xf32, #tpu.memory_space<vmem>>, vector<1x32xf32>
    %9 = vector.broadcast %8 : vector<1x32xf32> to vector<8x32xf32>
    %10 = arith.addf %7, %9 : vector<8x32xf32>
    %c0_12 = arith.constant 0 : index
    %c0_13 = arith.constant 0 : index
    %11 = vector.load %arg7[%c0_12, %c0_13] : memref<32x32xf32, #tpu.memory_space<vmem>>, vector<32x32xf32>
    %cst_14 = arith.constant dense<0.000000e+00> : vector<8x32xf32>
    %12 = tpu.matmul %3, %11, %cst_14 {dimension_numbers = #tpu.dot_dimension_numbers<[1], [0], [0], [1], [0, 0, 1, 1], [], []>} : vector<8x32xf32>, vector<32x32xf32>, vector<8x32xf32> -> vector<8x32xf32>
    %c0_15 = arith.constant 0 : index
    %c0_16 = arith.constant 0 : index
    %13 = vector.load %arg8[%c0_15, %c0_16] : memref<1x32xf32, #tpu.memory_space<vmem>>, vector<1x32xf32>
    %14 = vector.broadcast %13 : vector<1x32xf32> to vector<8x32xf32>
    %15 = arith.addf %12, %14 : vector<8x32xf32>
    %c0_17 = arith.constant 0 : index
    %c0_18 = arith.constant 0 : index
    %16 = vector.load %arg9[%c0_17, %c0_18] : memref<32x32xf32, #tpu.memory_space<vmem>>, vector<32x32xf32>
    %cst_19 = arith.constant dense<0.000000e+00> : vector<8x32xf32>
    %17 = tpu.matmul %5, %16, %cst_19 {dimension_numbers = #tpu.dot_dimension_numbers<[1], [0], [0], [1], [0, 0, 1, 1], [], []>} : vector<8x32xf32>, vector<32x32xf32>, vector<8x32xf32> -> vector<8x32xf32>
    %c0_20 = arith.constant 0 : index
    %c0_21 = arith.constant 0 : index
    %18 = vector.load %arg10[%c0_20, %c0_21] : memref<1x32xf32, #tpu.memory_space<vmem>>, vector<1x32xf32>
    %19 = vector.broadcast %18 : vector<1x32xf32> to vector<8x32xf32>
    %20 = arith.addf %17, %19 : vector<8x32xf32>
    %c0_22 = arith.constant 0 : index
    %c0_23 = arith.constant 0 : index
    %c0_24 = arith.constant 0 : index
    %21 = vector.load %arg4[%c0_22, %c0_23, %c0_24] : memref<1x8x8xi8, #tpu.memory_space<vmem>>, vector<1x8x8xi8>
    %22 = vector.shape_cast %21 : vector<1x8x8xi8> to vector<8x8xi8>
    %c0_i8 = arith.constant 0 : i8
    %23 = vector.broadcast %c0_i8 : i8 to vector<8x8xi8>
    %24 = arith.cmpi ne, %22, %23 : vector<8x8xi8>
    %25 = vector.extract_strided_slice %10 {offsets = [0, 0], sizes = [8, 8], strides = [1, 1]} : vector<8x32xf32> to vector<8x8xf32>
    %26 = vector.extract_strided_slice %15 {offsets = [0, 0], sizes = [8, 8], strides = [1, 1]} : vector<8x32xf32> to vector<8x8xf32>
    %27 = vector.extract_strided_slice %20 {offsets = [0, 0], sizes = [8, 8], strides = [1, 1]} : vector<8x32xf32> to vector<8x8xf32>
    %cst_25 = arith.constant dense<0.000000e+00> : vector<8x8xf32>
    %28 = tpu.matmul %25, %26, %cst_25 {dimension_numbers = #tpu.dot_dimension_numbers<[1], [1], [0], [0], [0, 0, 1, 0], [], []>} : vector<8x8xf32>, vector<8x8xf32>, vector<8x8xf32> -> vector<8x8xf32>
    %cst_26 = arith.constant 0.353553385 : f32
    %29 = vector.broadcast %cst_26 : f32 to vector<8x8xf32>
    %30 = arith.mulf %28, %29 : vector<8x8xf32>
    %cst_27 = arith.constant -1.000000e+09 : f32
    %31 = vector.broadcast %cst_27 : f32 to vector<8x8xf32>
    %32 = arith.select %24, %31, %30 : vector<8x8xi1>, vector<8x8xf32>
    %cst_28 = arith.constant dense<0xFF800000> : vector<8xf32>
    %33 = vector.multi_reduction <maximumf>, %32, %cst_28 [1] : vector<8x8xf32> to vector<8xf32>
    %34 = vector.shape_cast %33 : vector<8xf32> to vector<8x1xf32>
    %35 = vector.broadcast %34 : vector<8x1xf32> to vector<8x8xf32>
    %36 = arith.subf %32, %35 : vector<8x8xf32>
    %37 = math.exp %36 : vector<8x8xf32>
    %cst_29 = arith.constant dense<0.000000e+00> : vector<8xf32>
    %38 = vector.multi_reduction <add>, %37, %cst_29 [1] : vector<8x8xf32> to vector<8xf32>
    %39 = vector.shape_cast %38 : vector<8xf32> to vector<8x1xf32>
    %40 = tpu.reciprocal %39 {approx = true} : vector<8x1xf32> -> vector<8x1xf32>
    %41 = vector.broadcast %40 : vector<8x1xf32> to vector<8x8xf32>
    %42 = arith.mulf %37, %41 : vector<8x8xf32>
    %cst_30 = arith.constant dense<0.000000e+00> : vector<8x8xf32>
    %43 = tpu.matmul %42, %27, %cst_30 {dimension_numbers = #tpu.dot_dimension_numbers<[1], [0], [0], [1], [0, 0, 1, 1], [], []>} : vector<8x8xf32>, vector<8x8xf32>, vector<8x8xf32> -> vector<8x8xf32>
    %44 = vector.extract_strided_slice %10 {offsets = [0, 8], sizes = [8, 8], strides = [1, 1]} : vector<8x32xf32> to vector<8x8xf32>
    %45 = vector.extract_strided_slice %15 {offsets = [0, 8], sizes = [8, 8], strides = [1, 1]} : vector<8x32xf32> to vector<8x8xf32>
    %46 = vector.extract_strided_slice %20 {offsets = [0, 8], sizes = [8, 8], strides = [1, 1]} : vector<8x32xf32> to vector<8x8xf32>
    %cst_31 = arith.constant dense<0.000000e+00> : vector<8x8xf32>
    %47 = tpu.matmul %44, %45, %cst_31 {dimension_numbers = #tpu.dot_dimension_numbers<[1], [1], [0], [0], [0, 0, 1, 0], [], []>} : vector<8x8xf32>, vector<8x8xf32>, vector<8x8xf32> -> vector<8x8xf32>
    %cst_32 = arith.constant 0.353553385 : f32
    %48 = vector.broadcast %cst_32 : f32 to vector<8x8xf32>
    %49 = arith.mulf %47, %48 : vector<8x8xf32>
    %cst_33 = arith.constant -1.000000e+09 : f32
    %50 = vector.broadcast %cst_33 : f32 to vector<8x8xf32>
    %51 = arith.select %24, %50, %49 : vector<8x8xi1>, vector<8x8xf32>
    %cst_34 = arith.constant dense<0xFF800000> : vector<8xf32>
    %52 = vector.multi_reduction <maximumf>, %51, %cst_34 [1] : vector<8x8xf32> to vector<8xf32>
    %53 = vector.shape_cast %52 : vector<8xf32> to vector<8x1xf32>
    %54 = vector.broadcast %53 : vector<8x1xf32> to vector<8x8xf32>
    %55 = arith.subf %51, %54 : vector<8x8xf32>
    %56 = math.exp %55 : vector<8x8xf32>
    %cst_35 = arith.constant dense<0.000000e+00> : vector<8xf32>
    %57 = vector.multi_reduction <add>, %56, %cst_35 [1] : vector<8x8xf32> to vector<8xf32>
    %58 = vector.shape_cast %57 : vector<8xf32> to vector<8x1xf32>
    %59 = tpu.reciprocal %58 {approx = true} : vector<8x1xf32> -> vector<8x1xf32>
    %60 = vector.broadcast %59 : vector<8x1xf32> to vector<8x8xf32>
    %61 = arith.mulf %56, %60 : vector<8x8xf32>
    %cst_36 = arith.constant dense<0.000000e+00> : vector<8x8xf32>
    %62 = tpu.matmul %61, %46, %cst_36 {dimension_numbers = #tpu.dot_dimension_numbers<[1], [0], [0], [1], [0, 0, 1, 1], [], []>} : vector<8x8xf32>, vector<8x8xf32>, vector<8x8xf32> -> vector<8x8xf32>
    %63 = vector.extract_strided_slice %10 {offsets = [0, 16], sizes = [8, 8], strides = [1, 1]} : vector<8x32xf32> to vector<8x8xf32>
    %64 = vector.extract_strided_slice %15 {offsets = [0, 16], sizes = [8, 8], strides = [1, 1]} : vector<8x32xf32> to vector<8x8xf32>
    %65 = vector.extract_strided_slice %20 {offsets = [0, 16], sizes = [8, 8], strides = [1, 1]} : vector<8x32xf32> to vector<8x8xf32>
    %cst_37 = arith.constant dense<0.000000e+00> : vector<8x8xf32>
    %66 = tpu.matmul %63, %64, %cst_37 {dimension_numbers = #tpu.dot_dimension_numbers<[1], [1], [0], [0], [0, 0, 1, 0], [], []>} : vector<8x8xf32>, vector<8x8xf32>, vector<8x8xf32> -> vector<8x8xf32>
    %cst_38 = arith.constant 0.353553385 : f32
    %67 = vector.broadcast %cst_38 : f32 to vector<8x8xf32>
    %68 = arith.mulf %66, %67 : vector<8x8xf32>
    %cst_39 = arith.constant -1.000000e+09 : f32
    %69 = vector.broadcast %cst_39 : f32 to vector<8x8xf32>
    %70 = arith.select %24, %69, %68 : vector<8x8xi1>, vector<8x8xf32>
    %cst_40 = arith.constant dense<0xFF800000> : vector<8xf32>
    %71 = vector.multi_reduction <maximumf>, %70, %cst_40 [1] : vector<8x8xf32> to vector<8xf32>
    %72 = vector.shape_cast %71 : vector<8xf32> to vector<8x1xf32>
    %73 = vector.broadcast %72 : vector<8x1xf32> to vector<8x8xf32>
    %74 = arith.subf %70, %73 : vector<8x8xf32>
    %75 = math.exp %74 : vector<8x8xf32>
    %cst_41 = arith.constant dense<0.000000e+00> : vector<8xf32>
    %76 = vector.multi_reduction <add>, %75, %cst_41 [1] : vector<8x8xf32> to vector<8xf32>
    %77 = vector.shape_cast %76 : vector<8xf32> to vector<8x1xf32>
    %78 = tpu.reciprocal %77 {approx = true} : vector<8x1xf32> -> vector<8x1xf32>
    %79 = vector.broadcast %78 : vector<8x1xf32> to vector<8x8xf32>
    %80 = arith.mulf %75, %79 : vector<8x8xf32>
    %cst_42 = arith.constant dense<0.000000e+00> : vector<8x8xf32>
    %81 = tpu.matmul %80, %65, %cst_42 {dimension_numbers = #tpu.dot_dimension_numbers<[1], [0], [0], [1], [0, 0, 1, 1], [], []>} : vector<8x8xf32>, vector<8x8xf32>, vector<8x8xf32> -> vector<8x8xf32>
    %82 = vector.extract_strided_slice %10 {offsets = [0, 24], sizes = [8, 8], strides = [1, 1]} : vector<8x32xf32> to vector<8x8xf32>
    %83 = vector.extract_strided_slice %15 {offsets = [0, 24], sizes = [8, 8], strides = [1, 1]} : vector<8x32xf32> to vector<8x8xf32>
    %84 = vector.extract_strided_slice %20 {offsets = [0, 24], sizes = [8, 8], strides = [1, 1]} : vector<8x32xf32> to vector<8x8xf32>
    %cst_43 = arith.constant dense<0.000000e+00> : vector<8x8xf32>
    %85 = tpu.matmul %82, %83, %cst_43 {dimension_numbers = #tpu.dot_dimension_numbers<[1], [1], [0], [0], [0, 0, 1, 0], [], []>} : vector<8x8xf32>, vector<8x8xf32>, vector<8x8xf32> -> vector<8x8xf32>
    %cst_44 = arith.constant 0.353553385 : f32
    %86 = vector.broadcast %cst_44 : f32 to vector<8x8xf32>
    %87 = arith.mulf %85, %86 : vector<8x8xf32>
    %cst_45 = arith.constant -1.000000e+09 : f32
    %88 = vector.broadcast %cst_45 : f32 to vector<8x8xf32>
    %89 = arith.select %24, %88, %87 : vector<8x8xi1>, vector<8x8xf32>
    %cst_46 = arith.constant dense<0xFF800000> : vector<8xf32>
    %90 = vector.multi_reduction <maximumf>, %89, %cst_46 [1] : vector<8x8xf32> to vector<8xf32>
    %91 = vector.shape_cast %90 : vector<8xf32> to vector<8x1xf32>
    %92 = vector.broadcast %91 : vector<8x1xf32> to vector<8x8xf32>
    %93 = arith.subf %89, %92 : vector<8x8xf32>
    %94 = math.exp %93 : vector<8x8xf32>
    %cst_47 = arith.constant dense<0.000000e+00> : vector<8xf32>
    %95 = vector.multi_reduction <add>, %94, %cst_47 [1] : vector<8x8xf32> to vector<8xf32>
    %96 = vector.shape_cast %95 : vector<8xf32> to vector<8x1xf32>
    %97 = tpu.reciprocal %96 {approx = true} : vector<8x1xf32> -> vector<8x1xf32>
    %98 = vector.broadcast %97 : vector<8x1xf32> to vector<8x8xf32>
    %99 = arith.mulf %94, %98 : vector<8x8xf32>
    %cst_48 = arith.constant dense<0.000000e+00> : vector<8x8xf32>
    %100 = tpu.matmul %99, %84, %cst_48 {dimension_numbers = #tpu.dot_dimension_numbers<[1], [0], [0], [1], [0, 0, 1, 1], [], []>} : vector<8x8xf32>, vector<8x8xf32>, vector<8x8xf32> -> vector<8x8xf32>
    %101 = tpu.concatenate %43, %62, %81, %100 in 1 : vector<8x8xf32>, vector<8x8xf32>, vector<8x8xf32>, vector<8x8xf32> -> vector<8x32xf32>
    %c0_49 = arith.constant 0 : index
    %c0_50 = arith.constant 0 : index
    %102 = vector.load %arg11[%c0_49, %c0_50] : memref<32x32xf32, #tpu.memory_space<vmem>>, vector<32x32xf32>
    %cst_51 = arith.constant dense<0.000000e+00> : vector<8x32xf32>
    %103 = tpu.matmul %101, %102, %cst_51 {dimension_numbers = #tpu.dot_dimension_numbers<[1], [0], [0], [1], [0, 0, 1, 1], [], []>} : vector<8x32xf32>, vector<32x32xf32>, vector<8x32xf32> -> vector<8x32xf32>
    %c0_52 = arith.constant 0 : index
    %c0_53 = arith.constant 0 : index
    %104 = vector.load %arg12[%c0_52, %c0_53] : memref<1x32xf32, #tpu.memory_space<vmem>>, vector<1x32xf32>
    %105 = vector.broadcast %104 : vector<1x32xf32> to vector<8x32xf32>
    %106 = arith.addf %103, %105 : vector<8x32xf32>
    %c0_54 = arith.constant 0 : index
    %c0_55 = arith.constant 0 : index
    %c0_56 = arith.constant 0 : index
    %107 = vector.load %arg13[%c0_54, %c0_55, %c0_56] : memref<1x8x32xf32, #tpu.memory_space<vmem>>, vector<1x8x32xf32>
    %108 = vector.shape_cast %107 : vector<1x8x32xf32> to vector<8x32xf32>
    %109 = vector.shape_cast %106 : vector<8x32xf32> to vector<1x8x32xf32>
    tpu.vector_store %arg13[%c0_54, %c0_55, %c0_56], %109 {strides = array<i32>} : memref<1x8x32xf32, #tpu.memory_space<vmem>>, vector<1x8x32xf32>,
    return
  }
  func.func @transform_0(%arg0: i32) -> (i32, i32, i32) {
    %c0_i32 = arith.constant 0 : i32
    %c0_i32_0 = arith.constant 0 : i32
    %c0_i32_1 = arith.constant 0 : i32
    return %arg0, %c0_i32, %c0_i32_0 : i32, i32, i32
  }
  func.func @transform_1(%arg0: i32) -> (i32, i32, i32) {
    %c0_i32 = arith.constant 0 : i32
    %c0_i32_0 = arith.constant 0 : i32
    %c0_i32_1 = arith.constant 0 : i32
    return %arg0, %c0_i32, %c0_i32_0 : i32, i32, i32
  }
  func.func @transform_2(%arg0: i32) -> (i32, i32, i32) {
    %c0_i32 = arith.constant 0 : i32
    %c0_i32_0 = arith.constant 0 : i32
    %c0_i32_1 = arith.constant 0 : i32
    return %arg0, %c0_i32, %c0_i32_0 : i32, i32, i32
  }
  func.func @transform_3(%arg0: i32) -> (i32, i32, i32) {
    %c0_i32 = arith.constant 0 : i32
    %c0_i32_0 = arith.constant 0 : i32
    %c0_i32_1 = arith.constant 0 : i32
    return %arg0, %c0_i32, %c0_i32_0 : i32, i32, i32
  }
  func.func @transform_4(%arg0: i32) -> (i32, i32) {
    %c0_i32 = arith.constant 0 : i32
    %c0_i32_0 = arith.constant 0 : i32
    %c0_i32_1 = arith.constant 0 : i32
    return %c0_i32, %c0_i32_0 : i32, i32
  }
  func.func @transform_5(%arg0: i32) -> (i32, i32) {
    %c0_i32 = arith.constant 0 : i32
    %c0_i32_0 = arith.constant 0 : i32
    %c0_i32_1 = arith.constant 0 : i32
    return %c0_i32, %c0_i32_0 : i32, i32
  }
  func.func @transform_6(%arg0: i32) -> (i32, i32) {
    %c0_i32 = arith.constant 0 : i32
    %c0_i32_0 = arith.constant 0 : i32
    %c0_i32_1 = arith.constant 0 : i32
    return %c0_i32, %c0_i32_0 : i32, i32
  }
  func.func @transform_7(%arg0: i32) -> (i32, i32) {
    %c0_i32 = arith.constant 0 : i32
    %c0_i32_0 = arith.constant 0 : i32
    %c0_i32_1 = arith.constant 0 : i32
    return %c0_i32, %c0_i32_0 : i32, i32
  }
  func.func @transform_8(%arg0: i32) -> (i32, i32) {
    %c0_i32 = arith.constant 0 : i32
    %c0_i32_0 = arith.constant 0 : i32
    %c0_i32_1 = arith.constant 0 : i32
    return %c0_i32, %c0_i32_0 : i32, i32
  }
  func.func @transform_9(%arg0: i32) -> (i32, i32) {
    %c0_i32 = arith.constant 0 : i32
    %c0_i32_0 = arith.constant 0 : i32
    %c0_i32_1 = arith.constant 0 : i32
    return %c0_i32, %c0_i32_0 : i32, i32
  }
  func.func @transform_10(%arg0: i32) -> (i32, i32) {
    %c0_i32 = arith.constant 0 : i32
    %c0_i32_0 = arith.constant 0 : i32
    %c0_i32_1 = arith.constant 0 : i32
    return %c0_i32, %c0_i32_0 : i32, i32
  }
  func.func @transform_11(%arg0: i32) -> (i32, i32) {
    %c0_i32 = arith.constant 0 : i32
    %c0_i32_0 = arith.constant 0 : i32
    %c0_i32_1 = arith.constant 0 : i32
    return %c0_i32, %c0_i32_0 : i32, i32
  }
  func.func @transform_12(%arg0: i32) -> (i32, i32, i32) {
    %c0_i32 = arith.constant 0 : i32
    %c0_i32_0 = arith.constant 0 : i32
    %c0_i32_1 = arith.constant 0 : i32
    return %arg0, %c0_i32, %c0_i32_0 : i32, i32, i32
  }
}

</mosaic_0001>

<llo_original>
// kernel: tpu_custom_call.1
$region0: #{tpu_custom_call.1}
  #allocation0 [shape = 'u32[]', space=smem, size = 0x4, offset = 0x4, fixed_abs, tag = 'smem constant byte address 0x4 - core index']
  #allocation1 [shape = 'u32[144,128]{1,0:T(1,128)}', space=vmem, size = 0x12000, scoped, tag = 'internal scratch']
  %s0 = inlined_call_operand.hbm [shape: f32[2,8,32], index: 0, kind: input, shape index: {}]
  %s1 = inlined_call_operand.hbm [shape: f32[2,8,32], index: 1, kind: input, shape index: {}]
  %s2 = inlined_call_operand.hbm [shape: f32[2,8,32], index: 2, kind: input, shape index: {}]
  %s3 = inlined_call_operand.vmem [shape: s8[2,8,8], index: 3, kind: input, shape index: {}]
  %s4 = inlined_call_operand.hbm [shape: f32[32,32], index: 4, kind: input, shape index: {}]
  %s5 = inlined_call_operand.vmem [shape: f32[1,32], index: 5, kind: input, shape index: {}]
  %s6 = inlined_call_operand.hbm [shape: f32[32,32], index: 6, kind: input, shape index: {}]
  %s7 = inlined_call_operand.hbm [shape: f32[1,32], index: 7, kind: input, shape index: {}]
  %s8 = inlined_call_operand.hbm [shape: f32[32,32], index: 8, kind: input, shape index: {}]
  %s9 = inlined_call_operand.hbm [shape: f32[1,32], index: 9, kind: input, shape index: {}]
  %s10 = inlined_call_operand.vmem [shape: f32[32,32], index: 10, kind: input, shape index: {}]
  %s11 = inlined_call_operand.vmem [shape: f32[1,32], index: 11, kind: input, shape index: {}]
  %s12 = inlined_call_operand.hbm [shape: f32[2,8,32], index: 12, kind: output, shape index: {}]
  %s13 = sld [smem:[#allocation0]]
  $region113: #{tpu_custom_call.1} parent=0
    _
  %s15 = ssub.s32 1, %s13
  %s16 = scalar_select 0, %s15, %s13
  $region1: #{tpu_custom_call.1} parent=0
    #allocation2 [shape = 'u8[8192]{0}', space=vmem, size = 0x2000, scoped, tag = 'input window, operand 0']
    #allocation3 [shape = 's32[2]{0}', space=sflag, size = 0x8, scoped, tag = 'scoped memory for tpu_custom_call.1']
    #allocation4 [shape = 's32[2]{0}', space=sflag, size = 0x8, scoped, tag = 'scoped memory for tpu_custom_call.1']
    #allocation5 [shape = 'u8[8192]{0}', space=vmem, size = 0x2000, scoped, tag = 'input window, operand 1']
    #allocation6 [shape = 's32[2]{0}', space=sflag, size = 0x8, scoped, tag = 'scoped memory for tpu_custom_call.1']
    #allocation7 [shape = 'u8[8192]{0}', space=vmem, size = 0x2000, scoped, tag = 'input window, operand 2']
    #allocation8 [shape = 'u8[16384]{0}', space=vmem, size = 0x4000, scoped, tag = 'input window, operand 4, single buffered']
    #allocation9 [shape = 's32[1]{0}', space=sflag, size = 0x4, scoped, tag = 'scoped memory for tpu_custom_call.1']
    #allocation10 [shape = 'u8[16384]{0}', space=vmem, size = 0x4000, scoped, tag = 'input window, operand 6, single buffered']
    #allocation11 [shape = 'u8[512]{0}', space=vmem, size = 0x400, scoped, tag = 'input window, operand 7, single buffered']
    #allocation12 [shape = 's32[1]{0}', space=sflag, size = 0x4, scoped, tag = 'scoped memory for tpu_custom_call.1']
    #allocation13 [shape = 'u8[16384]{0}', space=vmem, size = 0x4000, scoped, tag = 'input window, operand 8, single buffered']
    #allocation14 [shape = 'u8[512]{0}', space=vmem, size = 0x400, scoped, tag = 'input window, operand 9, single buffered']
    #allocation15 [shape = 's32[1]{0}', space=sflag, size = 0x4, scoped, tag = 'scoped memory for tpu_custom_call.1']
    #allocation16 [shape = 'u8[8192]{0}', space=vmem, size = 0x2000, scoped, tag = 'output window, operand 0']
    %17 = vsyncpa [#allocation3], 0
    %s18 = scalar_lea.sflag [#allocation3], 1
    %19 = vsyncpa %s18, 0
    %20 = vsyncpa [#allocation6], 0
    %s21 = scalar_lea.sflag [#allocation6], 1
    %22 = vsyncpa %s21, 0
    %23 = vsyncpa [#allocation9], 0
    %24 = vsyncpa [#allocation12], 0
    %25 = vsyncpa [#allocation15], 0
    %26 = vsyncpa [#allocation4], 0
    %s27 = scalar_lea.sflag [#allocation4], 1
    %28 = vsyncpa %s27, 0
    loop: start=0, step=1, limit=4
    $region2: #{tpu_custom_call.1} parent=1 // loop_pre_header
      _
    $region3: #{tpu_custom_call.1} parent=1 // loop_header
      %s30 = sphi 0, %s34
      %p31 = scmp.ge.s32.totalorder %s30, 4
      %s40 = sphi 0, %s42
      %s43 = sphi 0, %s40
      %s44 = sphi 0, %s43
      %s60 = sphi 0, %s44
      %s66 = sphi 0, %s68
      %s69 = sphi 0, %s66
      %s70 = sphi 0, %s69
      %s86 = sphi 0, %s70
      %s92 = sphi 0, %s94
      %s95 = sphi 0, %s92
      %s96 = sphi 0, %s95
      %s112 = sphi 0, %s96
      %s118 = sphi 0, %s120
      %s121 = sphi 0, %s118
      %s122 = sphi 0, %s121
      %s138 = sphi 0, %s122
      %s142 = sphi 0, %s142
      %s144 = sphi 0, %s142
      %s145 = sphi 0, %s144
      %s159 = sphi 0, %s145
      %s163 = sphi 0, %s163
      %s165 = sphi 0, %s163
      %s166 = sphi 0, %s165
      %s180 = sphi 0, %s166
      %s184 = sphi 0, %s184
      %s186 = sphi 0, %s184
      %s187 = sphi 0, %s186
      %s201 = sphi 0, %s187
      %s205 = sphi 0, %s205
      %s207 = sphi 0, %s205
      %s208 = sphi 0, %s207
      %s222 = sphi 0, %s208
      %s226 = sphi 0, %s226
      %s228 = sphi 0, %s226
      %s229 = sphi 0, %s228
      %s243 = sphi 0, %s229
      %s247 = sphi 0, %s247
      %s249 = sphi 0, %s247
      %s250 = sphi 0, %s249
      %s264 = sphi 0, %s250
      %s268 = sphi 0, %s268
      %s270 = sphi 0, %s268
      %s271 = sphi 0, %s270
      %s285 = sphi 0, %s271
      %s289 = sphi 0, %s289
      %s291 = sphi 0, %s289
      %s292 = sphi 0, %s291
      %s306 = sphi 0, %s292
      %s312 = sphi 0, %s314
      %s315 = sphi 0, %s312
      %s316 = sphi 0, %s315
      %s332 = sphi 0, %s316
    $region4: #{tpu_custom_call.1} parent=1 // loop_header_branch
      %33 = sbr.rel (%p31) target = $region8
    $region5: #{tpu_custom_call.1} parent=1 // loop_body
      %s35 = ssub.s32 %s30, 1
      %s36 = ssub.s32 %s30, 2
      %s37 = sadd.s32 %s30, 1
      %s38 = ssub.s32 %s30, %s37
      %p39 = scmp.eq.s32.totalorder %s38, 0
      %s41 = sadd.s32 %s40, 1
      %s42 = scalar_select %p39, %s40, %s41
      %p45 = pneg %p39
      %p46 = scmp.eq.s32.totalorder %s30, 1
      %p47 = por %p45, %p46
      %p48 = scmp.ne.s32.totalorder %s40, %s43
      %p49 = scmp.eq.s32.totalorder %s30, 0
      %p50 = por %p48, %p49
      %p51 = scmp.ne.s32.totalorder %s40, %s43
      %p52 = scmp.eq.s32.totalorder %s35, 1
      %p53 = por %p51, %p52
      %p54 = scmp.ne.s32.totalorder %s43, %s44
      %p55 = scmp.eq.s32.totalorder %s35, 0
      %p56 = por %p54, %p55
      %p57 = scmp.ne.s32.totalorder %s43, %s44
      %p58 = scmp.eq.s32.totalorder %s36, 1
      %p59 = por %p57, %p58
      %p61 = scmp.ne.s32.totalorder %s44, %s60
      %p62 = scmp.eq.s32.totalorder %s36, 0
      %p63 = por %p61, %p62
      %s64 = ssub.s32 %s30, %s37
      %p65 = scmp.eq.s32.totalorder %s64, 0
      %s67 = sadd.s32 %s66, 1
      %s68 = scalar_select %p65, %s66, %s67
      %p71 = pneg %p65
      %p72 = scmp.eq.s32.totalorder %s30, 1
      %p73 = por %p71, %p72
      %p74 = scmp.ne.s32.totalorder %s66, %s69
      %p75 = scmp.eq.s32.totalorder %s30, 0
      %p76 = por %p74, %p75
      %p77 = scmp.ne.s32.totalorder %s66, %s69
      %p78 = scmp.eq.s32.totalorder %s35, 1
      %p79 = por %p77, %p78
      %p80 = scmp.ne.s32.totalorder %s69, %s70
      %p81 = scmp.eq.s32.totalorder %s35, 0
      %p82 = por %p80, %p81
      %p83 = scmp.ne.s32.totalorder %s69, %s70
      %p84 = scmp.eq.s32.totalorder %s36, 1
      %p85 = por %p83, %p84
      %p87 = scmp.ne.s32.totalorder %s70, %s86
      %p88 = scmp.eq.s32.totalorder %s36, 0
      %p89 = por %p87, %p88
      %s90 = ssub.s32 %s30, %s37
      %p91 = scmp.eq.s32.totalorder %s90, 0
      %s93 = sadd.s32 %s92, 1
      %s94 = scalar_select %p91, %s92, %s93
      %p97 = pneg %p91
      %p98 = scmp.eq.s32.totalorder %s30, 1
      %p99 = por %p97, %p98
      %p100 = scmp.ne.s32.totalorder %s92, %s95
      %p101 = scmp.eq.s32.totalorder %s30, 0
      %p102 = por %p100, %p101
      %p103 = scmp.ne.s32.totalorder %s92, %s95
      %p104 = scmp.eq.s32.totalorder %s35, 1
      %p105 = por %p103, %p104
      %p106 = scmp.ne.s32.totalorder %s95, %s96
      %p107 = scmp.eq.s32.totalorder %s35, 0
      %p108 = por %p106, %p107
      %p109 = scmp.ne.s32.totalorder %s95, %s96
      %p110 = scmp.eq.s32.totalorder %s36, 1
      %p111 = por %p109, %p110
      %p113 = scmp.ne.s32.totalorder %s96, %s112
      %p114 = scmp.eq.s32.totalorder %s36, 0
      %p115 = por %p113, %p114
      %s116 = ssub.s32 %s30, %s37
      %p117 = scmp.eq.s32.totalorder %s116, 0
      %s119 = sadd.s32 %s118, 1
      %s120 = scalar_select %p117, %s118, %s119
      %p123 = pneg %p117
      %p124 = scmp.eq.s32.totalorder %s30, 1
      %p125 = por %p123, %p124
      %p126 = scmp.ne.s32.totalorder %s118, %s121
      %p127 = scmp.eq.s32.totalorder %s30, 0
      %p128 = por %p126, %p127
      %p129 = scmp.ne.s32.totalorder %s118, %s121
      %p130 = scmp.eq.s32.totalorder %s35, 1
      %p131 = por %p129, %p130
      %p132 = scmp.ne.s32.totalorder %s121, %s122
      %p133 = scmp.eq.s32.totalorder %s35, 0
      %p134 = por %p132, %p133
      %p135 = scmp.ne.s32.totalorder %s121, %s122
      %p136 = scmp.eq.s32.totalorder %s36, 1
      %p137 = por %p135, %p136
      %p139 = scmp.ne.s32.totalorder %s122, %s138
      %p140 = scmp.eq.s32.totalorder %s36, 0
      %p141 = por %p139, %p140
      %s143 = sadd.s32 %s142, 1
      %p146 = scmp.eq.s32.totalorder %s30, 1
      %p147 = scmp.ne.s32.totalorder %s142, %s144
      %p148 = scmp.eq.s32.totalorder %s30, 0
      %p149 = por %p147, %p148
      %p150 = scmp.ne.s32.totalorder %s142, %s144
      %p151 = scmp.eq.s32.totalorder %s35, 1
      %p152 = por %p150, %p151
      %p153 = scmp.ne.s32.totalorder %s144, %s145
      %p154 = scmp.eq.s32.totalorder %s35, 0
      %p155 = por %p153, %p154
      %p156 = scmp.ne.s32.totalorder %s144, %s145
      %p157 = scmp.eq.s32.totalorder %s36, 1
      %p158 = por %p156, %p157
      %p160 = scmp.ne.s32.totalorder %s145, %s159
      %p161 = scmp.eq.s32.totalorder %s36, 0
      %p162 = por %p160, %p161
      %s164 = sadd.s32 %s163, 1
      %p167 = scmp.eq.s32.totalorder %s30, 1
      %p168 = scmp.ne.s32.totalorder %s163, %s165
      %p169 = scmp.eq.s32.totalorder %s30, 0
      %p170 = por %p168, %p169
      %p171 = scmp.ne.s32.totalorder %s163, %s165
      %p172 = scmp.eq.s32.totalorder %s35, 1
      %p173 = por %p171, %p172
      %p174 = scmp.ne.s32.totalorder %s165, %s166
      %p175 = scmp.eq.s32.totalorder %s35, 0
      %p176 = por %p174, %p175
      %p177 = scmp.ne.s32.totalorder %s165, %s166
      %p178 = scmp.eq.s32.totalorder %s36, 1
      %p179 = por %p177, %p178
      %p181 = scmp.ne.s32.totalorder %s166, %s180
      %p182 = scmp.eq.s32.totalorder %s36, 0
      %p183 = por %p181, %p182
      %s185 = sadd.s32 %s184, 1
      %p188 = scmp.eq.s32.totalorder %s30, 1
      %p189 = scmp.ne.s32.totalorder %s184, %s186
      %p190 = scmp.eq.s32.totalorder %s30, 0
      %p191 = por %p189, %p190
      %p192 = scmp.ne.s32.totalorder %s184, %s186
      %p193 = scmp.eq.s32.totalorder %s35, 1
      %p194 = por %p192, %p193
      %p195 = scmp.ne.s32.totalorder %s186, %s187
      %p196 = scmp.eq.s32.totalorder %s35, 0
      %p197 = por %p195, %p196
      %p198 = scmp.ne.s32.totalorder %s186, %s187
      %p199 = scmp.eq.s32.totalorder %s36, 1
      %p200 = por %p198, %p199
      %p202 = scmp.ne.s32.totalorder %s187, %s201
      %p203 = scmp.eq.s32.totalorder %s36, 0
      %p204 = por %p202, %p203
      %s206 = sadd.s32 %s205, 1
      %p209 = scmp.eq.s32.totalorder %s30, 1
      %p210 = scmp.ne.s32.totalorder %s205, %s207
      %p211 = scmp.eq.s32.totalorder %s30, 0
      %p212 = por %p210, %p211
      %p213 = scmp.ne.s32.totalorder %s205, %s207
      %p214 = scmp.eq.s32.totalorder %s35, 1
      %p215 = por %p213, %p214
      %p216 = scmp.ne.s32.totalorder %s207, %s208
      %p217 = scmp.eq.s32.totalorder %s35, 0
      %p218 = por %p216, %p217
      %p219 = scmp.ne.s32.totalorder %s207, %s208
      %p220 = scmp.eq.s32.totalorder %s36, 1
      %p221 = por %p219, %p220
      %p223 = scmp.ne.s32.totalorder %s208, %s222
      %p224 = scmp.eq.s32.totalorder %s36, 0
      %p225 = por %p223, %p224
      %s227 = sadd.s32 %s226, 1
      %p230 = scmp.eq.s32.totalorder %s30, 1
      %p231 = scmp.ne.s32.totalorder %s226, %s228
      %p232 = scmp.eq.s32.totalorder %s30, 0
      %p233 = por %p231, %p232
      %p234 = scmp.ne.s32.totalorder %s226, %s228
      %p235 = scmp.eq.s32.totalorder %s35, 1
      %p236 = por %p234, %p235
      %p237 = scmp.ne.s32.totalorder %s228, %s229
      %p238 = scmp.eq.s32.totalorder %s35, 0
      %p239 = por %p237, %p238
      %p240 = scmp.ne.s32.totalorder %s228, %s229
      %p241 = scmp.eq.s32.totalorder %s36, 1
      %p242 = por %p240, %p241
      %p244 = scmp.ne.s32.totalorder %s229, %s243
      %p245 = scmp.eq.s32.totalorder %s36, 0
      %p246 = por %p244, %p245
      %s248 = sadd.s32 %s247, 1
      %p251 = scmp.eq.s32.totalorder %s30, 1
      %p252 = scmp.ne.s32.totalorder %s247, %s249
      %p253 = scmp.eq.s32.totalorder %s30, 0
      %p254 = por %p252, %p253
      %p255 = scmp.ne.s32.totalorder %s247, %s249
      %p256 = scmp.eq.s32.totalorder %s35, 1
      %p257 = por %p255, %p256
      %p258 = scmp.ne.s32.totalorder %s249, %s250
      %p259 = scmp.eq.s32.totalorder %s35, 0
      %p260 = por %p258, %p259
      %p261 = scmp.ne.s32.totalorder %s249, %s250
      %p262 = scmp.eq.s32.totalorder %s36, 1
      %p263 = por %p261, %p262
      %p265 = scmp.ne.s32.totalorder %s250, %s264
      %p266 = scmp.eq.s32.totalorder %s36, 0
      %p267 = por %p265, %p266
      %s269 = sadd.s32 %s268, 1
      %p272 = scmp.eq.s32.totalorder %s30, 1
      %p273 = scmp.ne.s32.totalorder %s268, %s270
      %p274 = scmp.eq.s32.totalorder %s30, 0
      %p275 = por %p273, %p274
      %p276 = scmp.ne.s32.totalorder %s268, %s270
      %p277 = scmp.eq.s32.totalorder %s35, 1
      %p278 = por %p276, %p277
      %p279 = scmp.ne.s32.totalorder %s270, %s271
      %p280 = scmp.eq.s32.totalorder %s35, 0
      %p281 = por %p279, %p280
      %p282 = scmp.ne.s32.totalorder %s270, %s271
      %p283 = scmp.eq.s32.totalorder %s36, 1
      %p284 = por %p282, %p283
      %p286 = scmp.ne.s32.totalorder %s271, %s285
      %p287 = scmp.eq.s32.totalorder %s36, 0
      %p288 = por %p286, %p287
      %s290 = sadd.s32 %s289, 1
      %p293 = scmp.eq.s32.totalorder %s30, 1
      %p294 = scmp.ne.s32.totalorder %s289, %s291
      %p295 = scmp.eq.s32.totalorder %s30, 0
      %p296 = por %p294, %p295
      %p297 = scmp.ne.s32.totalorder %s289, %s291
      %p298 = scmp.eq.s32.totalorder %s35, 1
      %p299 = por %p297, %p298
      %p300 = scmp.ne.s32.totalorder %s291, %s292
      %p301 = scmp.eq.s32.totalorder %s35, 0
      %p302 = por %p300, %p301
      %p303 = scmp.ne.s32.totalorder %s291, %s292
      %p304 = scmp.eq.s32.totalorder %s36, 1
      %p305 = por %p303, %p304
      %p307 = scmp.ne.s32.totalorder %s292, %s306
      %p308 = scmp.eq.s32.totalorder %s36, 0
      %p309 = por %p307, %p308
      %s310 = ssub.s32 %s30, %s37
      %p311 = scmp.eq.s32.totalorder %s310, 0
      %s313 = sadd.s32 %s312, 1
      %s314 = scalar_select %p311, %s312, %s313
      %p317 = pneg %p311
      %p318 = scmp.eq.s32.totalorder %s30, 1
      %p319 = por %p317, %p318
      %p320 = scmp.ne.s32.totalorder %s312, %s315
      %p321 = scmp.eq.s32.totalorder %s30, 0
      %p322 = por %p320, %p321
      %p323 = scmp.ne.s32.totalorder %s312, %s315
      %p324 = scmp.eq.s32.totalorder %s35, 1
      %p325 = por %p323, %p324
      %p326 = scmp.ne.s32.totalorder %s315, %s316
      %p327 = scmp.eq.s32.totalorder %s35, 0
      %p328 = por %p326, %p327
      %p329 = scmp.ne.s32.totalorder %s315, %s316
      %p330 = scmp.eq.s32.totalorder %s36, 1
      %p331 = por %p329, %p330
      %p333 = scmp.ne.s32.totalorder %s316, %s332
      %p334 = scmp.eq.s32.totalorder %s36, 0
      %p335 = por %p333, %p334
      %p336 = scmp.le.s32.totalorder 1, %s30
      %p337 = scmp.lt.s32.totalorder %s30, 3
      %p338 = pnand %p336, %p337
      %p339 = pneg %p338
      // Predicated region
      $region9: #{tpu_custom_call.1} parent=5 // pred_check
        _
      $region10: #{tpu_custom_call.1} parent=5 // pred_check_branch
        %341 = sbr.rel (%p338) target = $region12
      $region11: #{tpu_custom_call.1} parent=5 // pred_region
        %s342 = ssub.s32 %s30, 1
        // Predicated region
        $region13: #{tpu_custom_call.1} parent=11 // pred_check
          %p343 = pneg %p155
        $region14: #{tpu_custom_call.1} parent=11 // pred_check_branch
          %345 = sbr.rel (%p343) target = $region16
        $region15: #{tpu_custom_call.1} parent=11 // pred_region
          %s347 = ssub.s32 512, 512
          %348 = vsyncadd [#allocation9], %s347
          %s349 = sshll.u32 [#allocation8], 4
          %s350 = int_to_ptr.vmem [resolvable:$true] %s349
          %355 = dma.hbm_to_vmem [thread:$0]  %s4, 512, %s350, [#allocation9], 128, 128, 8
        $region16: #{tpu_custom_call.1} parent=11 // pred_fallthru
          _
        // Predicated region
        $region17: #{tpu_custom_call.1} parent=11 // pred_check
          %p356 = pneg %p176
        $region18: #{tpu_custom_call.1} parent=11 // pred_check_branch
          %358 = sbr.rel (%p356) target = $region20
        $region19: #{tpu_custom_call.1} parent=11 // pred_region
          _
        $region20: #{tpu_custom_call.1} parent=11 // pred_fallthru
          _
        // Predicated region
        $region21: #{tpu_custom_call.1} parent=11 // pred_check
          %p359 = pneg %p197
        $region22: #{tpu_custom_call.1} parent=11 // pred_check_branch
          %361 = sbr.rel (%p359) target = $region24
        $region23: #{tpu_custom_call.1} parent=11 // pred_region
          %s363 = ssub.s32 512, 512
          %364 = vsyncadd [#allocation9], %s363
          %s365 = sshll.u32 [#allocation10], 4
          %s366 = int_to_ptr.vmem [resolvable:$true] %s365
          %371 = dma.hbm_to_vmem [thread:$0]  %s6, 512, %s366, [#allocation9], 128, 128, 8
        $region24: #{tpu_custom_call.1} parent=11 // pred_fallthru
          _
        // Predicated region
        $region25: #{tpu_custom_call.1} parent=11 // pred_check
          %p372 = pneg %p218
        $region26: #{tpu_custom_call.1} parent=11 // pred_check_branch
          %374 = sbr.rel (%p372) target = $region28
        $region27: #{tpu_custom_call.1} parent=11 // pred_region
          %s376 = ssub.s32 16, 16
          %377 = vsyncadd [#allocation12], %s376
          %s379 = sshll.u32 [#allocation11], 4
          %s380 = int_to_ptr.vmem [resolvable:$true] %s379
          %382 = dma.hbm_to_vmem [thread:$0]  %s7, 16, %s380, [#allocation12]
        $region28: #{tpu_custom_call.1} parent=11 // pred_fallthru
          _
        // Predicated region
        $region29: #{tpu_custom_call.1} parent=11 // pred_check
          %p383 = pneg %p239
        $region30: #{tpu_custom_call.1} parent=11 // pred_check_branch
          %385 = sbr.rel (%p383) target = $region32
        $region31: #{tpu_custom_call.1} parent=11 // pred_region
          %s387 = ssub.s32 512, 512
          %388 = vsyncadd [#allocation12], %s387
          %s389 = sshll.u32 [#allocation13], 4
          %s390 = int_to_ptr.vmem [resolvable:$true] %s389
          %395 = dma.hbm_to_vmem [thread:$0]  %s8, 512, %s390, [#allocation12], 128, 128, 8
        $region32: #{tpu_custom_call.1} parent=11 // pred_fallthru
          _
        // Predicated region
        $region33: #{tpu_custom_call.1} parent=11 // pred_check
          %p396 = pneg %p260
        $region34: #{tpu_custom_call.1} parent=11 // pred_check_branch
          %398 = sbr.rel (%p396) target = $region36
        $region35: #{tpu_custom_call.1} parent=11 // pred_region
          %s400 = ssub.s32 16, 16
          %401 = vsyncadd [#allocation15], %s400
          %s403 = sshll.u32 [#allocation14], 4
          %s404 = int_to_ptr.vmem [resolvable:$true] %s403
          %406 = dma.hbm_to_vmem [thread:$0]  %s9, 16, %s404, [#allocation15]
        $region36: #{tpu_custom_call.1} parent=11 // pred_fallthru
          _
        // Predicated region
        $region37: #{tpu_custom_call.1} parent=11 // pred_check
          %p407 = pneg %p281
        $region38: #{tpu_custom_call.1} parent=11 // pred_check_branch
          %409 = sbr.rel (%p407) target = $region40
        $region39: #{tpu_custom_call.1} parent=11 // pred_region
          _
        $region40: #{tpu_custom_call.1} parent=11 // pred_fallthru
          _
        // Predicated region
        $region41: #{tpu_custom_call.1} parent=11 // pred_check
          %p410 = pneg %p302
        $region42: #{tpu_custom_call.1} parent=11 // pred_check_branch
          %412 = sbr.rel (%p410) target = $region44
        $region43: #{tpu_custom_call.1} parent=11 // pred_region
          _
        $region44: #{tpu_custom_call.1} parent=11 // pred_fallthru
          _
      $region12: #{tpu_custom_call.1} parent=5 // pred_fallthru
        _
      %p413 = scmp.lt.s32.totalorder %s30, 2
      // Predicated region
      $region45: #{tpu_custom_call.1} parent=5 // pred_check
        %p414 = pneg %p413
      $region46: #{tpu_custom_call.1} parent=5 // pred_check_branch
        %416 = sbr.rel (%p414) target = $region48
      $region47: #{tpu_custom_call.1} parent=5 // pred_region
        // Predicated region
        $region49: #{tpu_custom_call.1} parent=47 // pred_check
          %p417 = pneg %p50
        $region50: #{tpu_custom_call.1} parent=47 // pred_check_branch
          %419 = sbr.rel (%p417) target = $region52
        $region51: #{tpu_custom_call.1} parent=47 // pred_region
          %s420 = sand.u32 %s40, 1
          %s421 = scalar_lea.sflag [#allocation3], %s420
          %s422 = sand.u32 %s40, 1
          %s423 = smul.addr %s422, 8
          %s424 = scalar_lea.vmem [#allocation2], %s423
          %s426 = ssub.s32 128, 128
          %427 = vsyncadd %s421, %s426
          %s428 = smul.addr %s30, 128
          %s429 = scalar_lea.hbm %s0, %s428
          %s431 = sshll.u32 %s424, 4
          %s432 = int_to_ptr.vmem [resolvable:$true] %s431
          %434 = dma.hbm_to_vmem [thread:$0]  %s429, 128, %s432, %s421
        $region52: #{tpu_custom_call.1} parent=47 // pred_fallthru
          _
        // Predicated region
        $region53: #{tpu_custom_call.1} parent=47 // pred_check
          %p435 = pneg %p76
        $region54: #{tpu_custom_call.1} parent=47 // pred_check_branch
          %437 = sbr.rel (%p435) target = $region56
        $region55: #{tpu_custom_call.1} parent=47 // pred_region
          %s438 = sand.u32 %s30, 1
          %s439 = scalar_lea.sflag [#allocation6], %s438
          %s440 = sand.u32 %s66, 1
          %s441 = smul.addr %s440, 8
          %s442 = scalar_lea.vmem [#allocation5], %s441
          %s444 = ssub.s32 128, 128
          %445 = vsyncadd %s439, %s444
          %s446 = smul.addr %s30, 128
          %s447 = scalar_lea.hbm %s1, %s446
          %s449 = sshll.u32 %s442, 4
          %s450 = int_to_ptr.vmem [resolvable:$true] %s449
          %452 = dma.hbm_to_vmem [thread:$0]  %s447, 128, %s450, %s439
        $region56: #{tpu_custom_call.1} parent=47 // pred_fallthru
          _
        // Predicated region
        $region57: #{tpu_custom_call.1} parent=47 // pred_check
          %p453 = pneg %p102
        $region58: #{tpu_custom_call.1} parent=47 // pred_check_branch
          %455 = sbr.rel (%p453) target = $region60
        $region59: #{tpu_custom_call.1} parent=47 // pred_region
          %s456 = sand.u32 %s30, 1
          %s457 = scalar_lea.sflag [#allocation6], %s456
          %s458 = sand.u32 %s92, 1
          %s459 = smul.addr %s458, 8
          %s460 = scalar_lea.vmem [#allocation7], %s459
          %s462 = ssub.s32 128, 128
          %463 = vsyncadd %s457, %s462
          %s464 = smul.addr %s30, 128
          %s465 = scalar_lea.hbm %s2, %s464
          %s467 = sshll.u32 %s460, 4
          %s468 = int_to_ptr.vmem [resolvable:$true] %s467
          %470 = dma.hbm_to_vmem [thread:$0]  %s465, 128, %s468, %s457
        $region60: #{tpu_custom_call.1} parent=47 // pred_fallthru
          _
        // Predicated region
        $region61: #{tpu_custom_call.1} parent=47 // pred_check
          %p471 = pneg %p128
        $region62: #{tpu_custom_call.1} parent=47 // pred_check_branch
          %473 = sbr.rel (%p471) target = $region64
        $region63: #{tpu_custom_call.1} parent=47 // pred_region
          %p474 = scmp.lt.s32.totalorder %s30, 1
          %s475 = scalar_select %p474, %s30, 1
          %s476 = smul.addr %s475, 2
          %s477 = scalar_lea.vmem %s3, %s476
        $region64: #{tpu_custom_call.1} parent=47 // pred_fallthru
          _
      $region48: #{tpu_custom_call.1} parent=5 // pred_fallthru
        _
      %p478 = scmp.le.s32.totalorder 1, %s30
      %p479 = scmp.lt.s32.totalorder %s30, 3
      %p480 = pnand %p478, %p479
      %p481 = pneg %p480
      // Predicated region
      $region65: #{tpu_custom_call.1} parent=5 // pred_check
        _
      $region66: #{tpu_custom_call.1} parent=5 // pred_check_branch
        %483 = sbr.rel (%p480) target = $region68
      $region67: #{tpu_custom_call.1} parent=5 // pred_region
        %s484 = ssub.s32 %s30, 1
        %s485 = sand.u32 %s43, 1
        %s486 = scalar_lea.sflag [#allocation3], %s485
        %s487 = sand.u32 %s43, 1
        %s488 = smul.addr %s487, 8
        %s489 = scalar_lea.vmem [#allocation2], %s488
        // Predicated region
        $region69: #{tpu_custom_call.1} parent=67 // pred_check
          %p490 = pneg %p56
        $region70: #{tpu_custom_call.1} parent=67 // pred_check_branch
          %492 = sbr.rel (%p490) target = $region72
        $region71: #{tpu_custom_call.1} parent=67 // pred_region
          %493 = dma.done %s486, 128
        $region72: #{tpu_custom_call.1} parent=67 // pred_fallthru
          _
        %s494 = sand.u32 %s35, 1
        %s495 = scalar_lea.sflag [#allocation6], %s494
        %s496 = sand.u32 %s69, 1
        %s497 = smul.addr %s496, 8
        %s498 = scalar_lea.vmem [#allocation5], %s497
        // Predicated region
        $region73: #{tpu_custom_call.1} parent=67 // pred_check
          %p499 = pneg %p82
        $region74: #{tpu_custom_call.1} parent=67 // pred_check_branch
          %501 = sbr.rel (%p499) target = $region76
        $region75: #{tpu_custom_call.1} parent=67 // pred_region
          %502 = dma.done %s495, 128
        $region76: #{tpu_custom_call.1} parent=67 // pred_fallthru
          _
        %s503 = sand.u32 %s35, 1
        %s504 = scalar_lea.sflag [#allocation6], %s503
        %s505 = sand.u32 %s95, 1
        %s506 = smul.addr %s505, 8
        %s507 = scalar_lea.vmem [#allocation7], %s506
        // Predicated region
        $region77: #{tpu_custom_call.1} parent=67 // pred_check
          %p508 = pneg %p108
        $region78: #{tpu_custom_call.1} parent=67 // pred_check_branch
          %510 = sbr.rel (%p508) target = $region80
        $region79: #{tpu_custom_call.1} parent=67 // pred_region
          %511 = dma.done %s504, 128
        $region80: #{tpu_custom_call.1} parent=67 // pred_fallthru
          _
        // Predicated region
        $region81: #{tpu_custom_call.1} parent=67 // pred_check
          %p512 = pneg %p155
        $region82: #{tpu_custom_call.1} parent=67 // pred_check_branch
          %514 = sbr.rel (%p512) target = $region84
        $region83: #{tpu_custom_call.1} parent=67 // pred_region
          %515 = dma.done [#allocation9], 512
        $region84: #{tpu_custom_call.1} parent=67 // pred_fallthru
          _
        // Predicated region
        $region85: #{tpu_custom_call.1} parent=67 // pred_check
          %p516 = pneg %p197
        $region86: #{tpu_custom_call.1} parent=67 // pred_check_branch
          %518 = sbr.rel (%p516) target = $region88
        $region87: #{tpu_custom_call.1} parent=67 // pred_region
          %519 = dma.done [#allocation9], 512
        $region88: #{tpu_custom_call.1} parent=67 // pred_fallthru
          _
        // Predicated region
        $region89: #{tpu_custom_call.1} parent=67 // pred_check
          %p520 = pneg %p218
        $region90: #{tpu_custom_call.1} parent=67 // pred_check_branch
          %522 = sbr.rel (%p520) target = $region92
        $region91: #{tpu_custom_call.1} parent=67 // pred_region
          %523 = dma.done [#allocation12], 16
        $region92: #{tpu_custom_call.1} parent=67 // pred_fallthru
          _
        // Predicated region
        $region93: #{tpu_custom_call.1} parent=67 // pred_check
          %p524 = pneg %p239
        $region94: #{tpu_custom_call.1} parent=67 // pred_check_branch
          %526 = sbr.rel (%p524) target = $region96
        $region95: #{tpu_custom_call.1} parent=67 // pred_region
          %527 = dma.done [#allocation12], 512
        $region96: #{tpu_custom_call.1} parent=67 // pred_fallthru
          _
        // Predicated region
        $region97: #{tpu_custom_call.1} parent=67 // pred_check
          %p528 = pneg %p260
        $region98: #{tpu_custom_call.1} parent=67 // pred_check_branch
          %530 = sbr.rel (%p528) target = $region100
        $region99: #{tpu_custom_call.1} parent=67 // pred_region
          %531 = dma.done [#allocation15], 16
        $region100: #{tpu_custom_call.1} parent=67 // pred_fallthru
          _
        %s532 = sand.u32 %s43, 1
        %s533 = scalar_lea.sflag [#allocation3], %s532
        %s534 = sand.u32 %s43, 1
        %s535 = smul.addr %s534, 8
        %s536 = scalar_lea.vmem [#allocation2], %s535
        %p537 = pneg %p56
        %p538 = pneg %p53
        %s539 = sand.u32 %s35, 1
        %s540 = scalar_lea.sflag [#allocation6], %s539
        %s541 = sand.u32 %s69, 1
        %s542 = smul.addr %s541, 8
        %s543 = scalar_lea.vmem [#allocation5], %s542
        %p544 = pneg %p82
        %p545 = pneg %p79
        %s546 = sand.u32 %s35, 1
        %s547 = scalar_lea.sflag [#allocation6], %s546
        %s548 = sand.u32 %s95, 1
        %s549 = smul.addr %s548, 8
        %s550 = scalar_lea.vmem [#allocation7], %s549
        %p551 = pneg %p108
        %p552 = pneg %p105
        %p553 = scmp.lt.s32.totalorder %s35, 1
        %s554 = scalar_select %p553, %s35, 1
        %s555 = smul.addr %s554, 2
        %s556 = scalar_lea.vmem %s3, %s555
        %p557 = pneg %p134
        %p558 = pneg %p131
        %p559 = pneg %p155
        %p560 = pneg %p152
        %p561 = pneg %p176
        %p562 = pneg %p173
        %p563 = pneg %p197
        %p564 = pneg %p194
        %p565 = pneg %p218
        %p566 = pneg %p215
        %p567 = pneg %p239
        %p568 = pneg %p236
        %p569 = pneg %p260
        %p570 = pneg %p257
        %p571 = pneg %p281
        %p572 = pneg %p278
        %p573 = pneg %p302
        %p574 = pneg %p299
        %p575 = pneg %p328
        %p576 = pneg %p325
        %s577 = sand.u32 %s315, 1
        %s578 = scalar_lea.sflag [#allocation4], %s577
        %s579 = sand.u32 %s315, 1
        %s580 = smul.addr %s579, 8
        %s581 = scalar_lea.vmem [#allocation16], %s580
        %p582 = scmp.lt.s32.totalorder %s35, 1
        %s583 = scalar_select %p582, %s35, 1
        %s584 = smul.addr %s583, 2
        %s585 = scalar_lea.vmem %s3, %s584
        %v588 = vld [vmem:[%s489] sm:$0xff]
        %v589 = vld [vmem:[%s498] sm:$0xff]
        %v590 = vld [vmem:[%s507] sm:$0xff]
        %v591 = vld [vmem:[#allocation8] sm:$0xff]
        %v592 = vld [vmem:[#allocation8 + $0x8] sm:$0xff]
        %v593 = vld [vmem:[#allocation8 + $0x10] sm:$0xff]
        %v594 = vld [vmem:[#allocation8 + $0x18] sm:$0xff]
        %v595 = vld [vmem:[%s5] sm:$0x1]
        %v597 = vlaneseq
        %v598 = vshrl.u32 %v597, 7
        %v599 = vsub.s32 0, %v598
        %v600 = vrot.slane %v595, %v599
        %vm602 = vcmask 261120
        %v604 = vsel %vm602, %v588, 0
        %606 = vmatprep.subr.mxu0 0.0
        %607 = vmatpush1.msra.mxu0 %v591
        %608 = vmatprep.subr.mxu0 0.0
        %609 = vmatpush1.msra.mxu0 %v592
        %610 = vmatprep.subr.mxu0 0.0
        %611 = vmatpush1.msra.mxu0 %v593
        %612 = vmatprep.subr.mxu0 0.0
        %613 = vmatpush1.msra.mxu0 %v594
        %614 = vmatprep.subr.mxu0 0.0
        %615 = vmatpush1.msra.mxu0 0.0
        %616 = vmatprep.subr.mxu0 0.0
        %617 = vmatpush1.msra.mxu0 0.0
        %618 = vmatprep.subr.mxu0 0.0
        %619 = vmatpush1.msra.mxu0 0.0
        %620 = vmatprep.subr.mxu0 0.0
        %621 = vmatpush1.msra.mxu0 0.0
        %622 = vmatprep.subr.mxu0 0.0
        %623 = vmatpush1.msra.mxu0 0.0
        %624 = vmatprep.subr.mxu0 0.0
        %625 = vmatpush1.msra.mxu0 0.0
        %626 = vmatprep.subr.mxu0 0.0
        %627 = vmatpush1.msra.mxu0 0.0
        %628 = vmatprep.subr.mxu0 0.0
        %629 = vmatpush1.msra.mxu0 0.0
        %630 = vmatprep.subr.mxu0 0.0
        %631 = vmatpush1.msra.mxu0 0.0
        %632 = vmatprep.subr.mxu0 0.0
        %633 = vmatpush1.msra.mxu0 0.0
        %634 = vmatprep.subr.mxu0 0.0
        %635 = vmatpush1.msra.mxu0 0.0
        %636 = vmatprep.subr.mxu0 0.0
        %637 = vmatpush1.msra.mxu0 0.0
        %638 = vmatprep.subr.mxu0 0.0
        %639 = vmatpush1.msra.mxu0 0.0
        %640 = vmatprep.subr.mxu0 0.0
        %641 = vmatpush1.msra.mxu0 0.0
        %642 = vmatprep.subr.mxu0 0.0
        %643 = vmatpush1.msra.mxu0 0.0
        %644 = vmatprep.subr.mxu0 0.0
        %645 = vmatpush1.msra.mxu0 0.0
        %646 = vmatprep.subr.mxu0 0.0
        %647 = vmatpush1.msra.mxu0 0.0
        %648 = vmatprep.subr.mxu0 0.0
        %649 = vmatpush1.msra.mxu0 0.0
        %650 = vmatprep.subr.mxu0 0.0
        %651 = vmatpush1.msra.mxu0 0.0
        %652 = vmatprep.subr.mxu0 0.0
        %653 = vmatpush1.msra.mxu0 0.0
        %654 = vmatprep.subr.mxu0 0.0
        %655 = vmatpush1.msra.mxu0 0.0
        %656 = vmatprep.subr.mxu0 0.0
        %657 = vmatpush1.msra.mxu0 0.0
        %658 = vmatprep.subr.mxu0 0.0
        %659 = vmatpush1.msra.mxu0 0.0
        %660 = vmatprep.subr.mxu0 0.0
        %661 = vmatpush1.msra.mxu0 0.0
        %662 = vmatprep.subr.mxu0 0.0
        %663 = vmatpush1.msra.mxu0 0.0
        %664 = vmatprep.subr.mxu0 0.0
        %665 = vmatpush1.msra.mxu0 0.0
        %666 = vmatprep.subr.mxu0 0.0
        %667 = vmatpush1.msra.mxu0 0.0
        %668 = vmatprep.subr.mxu0 0.0
        %669 = vmatpush1.msra.mxu0 0.0
        %670 = vmatprep.mubr.f32.mxu0 0.0
        %671 = vmatmul.mubr.f32.gmra.mrb[0].mxu0 %v604
        %v672 = vpop.f32.mrb[0].mxu0
        %v673 = vadd.f32 %v600, %v672
        %v674 = vpop.f32.mrb[0].mxu0
        %675 = vdwg.mxu0
        %v676 = vld [vmem:[#allocation10] sm:$0xff]
        %v677 = vld [vmem:[#allocation10 + $0x8] sm:$0xff]
        %v678 = vld [vmem:[#allocation10 + $0x10] sm:$0xff]
        %v679 = vld [vmem:[#allocation10 + $0x18] sm:$0xff]
        %v680 = vld [vmem:[#allocation11] sm:$0x1]
        %v682 = vlaneseq
        %v683 = vshrl.u32 %v682, 7
        %v684 = vsub.s32 0, %v683
        %v685 = vrot.slane %v680, %v684
        %v688 = vsel %vm602, %v589, 0
        %690 = vmatprep.subr.mxu0 0.0
        %691 = vmatpush1.msra.mxu0 %v676
        %692 = vmatprep.subr.mxu0 0.0
        %693 = vmatpush1.msra.mxu0 %v677
        %694 = vmatprep.subr.mxu0 0.0
        %695 = vmatpush1.msra.mxu0 %v678
        %696 = vmatprep.subr.mxu0 0.0
        %697 = vmatpush1.msra.mxu0 %v679
        %698 = vmatprep.subr.mxu0 0.0
        %699 = vmatpush1.msra.mxu0 0.0
        %700 = vmatprep.subr.mxu0 0.0
        %701 = vmatpush1.msra.mxu0 0.0
        %702 = vmatprep.subr.mxu0 0.0
        %703 = vmatpush1.msra.mxu0 0.0
        %704 = vmatprep.subr.mxu0 0.0
        %705 = vmatpush1.msra.mxu0 0.0
        %706 = vmatprep.subr.mxu0 0.0
        %707 = vmatpush1.msra.mxu0 0.0
        %708 = vmatprep.subr.mxu0 0.0
        %709 = vmatpush1.msra.mxu0 0.0
        %710 = vmatprep.subr.mxu0 0.0
        %711 = vmatpush1.msra.mxu0 0.0
        %712 = vmatprep.subr.mxu0 0.0
        %713 = vmatpush1.msra.mxu0 0.0
        %714 = vmatprep.subr.mxu0 0.0
        %715 = vmatpush1.msra.mxu0 0.0
        %716 = vmatprep.subr.mxu0 0.0
        %717 = vmatpush1.msra.mxu0 0.0
        %718 = vmatprep.subr.mxu0 0.0
        %719 = vmatpush1.msra.mxu0 0.0
        %720 = vmatprep.subr.mxu0 0.0
        %721 = vmatpush1.msra.mxu0 0.0
        %722 = vmatprep.subr.mxu0 0.0
        %723 = vmatpush1.msra.mxu0 0.0
        %724 = vmatprep.subr.mxu0 0.0
        %725 = vmatpush1.msra.mxu0 0.0
        %726 = vmatprep.subr.mxu0 0.0
        %727 = vmatpush1.msra.mxu0 0.0
        %728 = vmatprep.subr.mxu0 0.0
        %729 = vmatpush1.msra.mxu0 0.0
        %730 = vmatprep.subr.mxu0 0.0
        %731 = vmatpush1.msra.mxu0 0.0
        %732 = vmatprep.subr.mxu0 0.0
        %733 = vmatpush1.msra.mxu0 0.0
        %734 = vmatprep.subr.mxu0 0.0
        %735 = vmatpush1.msra.mxu0 0.0
        %736 = vmatprep.subr.mxu0 0.0
        %737 = vmatpush1.msra.mxu0 0.0
        %738 = vmatprep.subr.mxu0 0.0
        %739 = vmatpush1.msra.mxu0 0.0
        %740 = vmatprep.subr.mxu0 0.0
        %741 = vmatpush1.msra.mxu0 0.0
        %742 = vmatprep.subr.mxu0 0.0
        %743 = vmatpush1.msra.mxu0 0.0
        %744 = vmatprep.subr.mxu0 0.0
        %745 = vmatpush1.msra.mxu0 0.0
        %746 = vmatprep.subr.mxu0 0.0
        %747 = vmatpush1.msra.mxu0 0.0
        %748 = vmatprep.subr.mxu0 0.0
        %749 = vmatpush1.msra.mxu0 0.0
        %750 = vmatprep.subr.mxu0 0.0
        %751 = vmatpush1.msra.mxu0 0.0
        %752 = vmatprep.subr.mxu0 0.0
        %753 = vmatpush1.msra.mxu0 0.0
        %754 = vmatprep.mubr.f32.mxu0 0.0
        %755 = vmatmul.mubr.f32.gmra.mrb[0].mxu0 %v688
        %v756 = vpop.f32.mrb[0].mxu0
        %v757 = vadd.f32 %v685, %v756
        %v758 = vpop.f32.mrb[0].mxu0
        %759 = vdwg.mxu0
        %v760 = vld [vmem:[#allocation13] sm:$0xff]
        %v761 = vld [vmem:[#allocation13 + $0x8] sm:$0xff]
        %v762 = vld [vmem:[#allocation13 + $0x10] sm:$0xff]
        %v763 = vld [vmem:[#allocation13 + $0x18] sm:$0xff]
        %v764 = vld [vmem:[#allocation14] sm:$0x1]
        %v766 = vlaneseq
        %v767 = vshrl.u32 %v766, 7
        %v768 = vsub.s32 0, %v767
        %v769 = vrot.slane %v764, %v768
        %v772 = vsel %vm602, %v590, 0
        %774 = vmatprep.subr.mxu0 0.0
        %775 = vmatpush1.msra.mxu0 %v760
        %776 = vmatprep.subr.mxu0 0.0
        %777 = vmatpush1.msra.mxu0 %v761
        %778 = vmatprep.subr.mxu0 0.0
        %779 = vmatpush1.msra.mxu0 %v762
        %780 = vmatprep.subr.mxu0 0.0
        %781 = vmatpush1.msra.mxu0 %v763
        %782 = vmatprep.subr.mxu0 0.0
        %783 = vmatpush1.msra.mxu0 0.0
        %784 = vmatprep.subr.mxu0 0.0
        %785 = vmatpush1.msra.mxu0 0.0
        %786 = vmatprep.subr.mxu0 0.0
        %787 = vmatpush1.msra.mxu0 0.0
        %788 = vmatprep.subr.mxu0 0.0
        %789 = vmatpush1.msra.mxu0 0.0
        %790 = vmatprep.subr.mxu0 0.0
        %791 = vmatpush1.msra.mxu0 0.0
        %792 = vmatprep.subr.mxu0 0.0
        %793 = vmatpush1.msra.mxu0 0.0
        %794 = vmatprep.subr.mxu0 0.0
        %795 = vmatpush1.msra.mxu0 0.0
        %796 = vmatprep.subr.mxu0 0.0
        %797 = vmatpush1.msra.mxu0 0.0
        %798 = vmatprep.subr.mxu0 0.0
        %799 = vmatpush1.msra.mxu0 0.0
        %800 = vmatprep.subr.mxu0 0.0
        %801 = vmatpush1.msra.mxu0 0.0
        %802 = vmatprep.subr.mxu0 0.0
        %803 = vmatpush1.msra.mxu0 0.0
        %804 = vmatprep.subr.mxu0 0.0
        %805 = vmatpush1.msra.mxu0 0.0
        %806 = vmatprep.subr.mxu0 0.0
        %807 = vmatpush1.msra.mxu0 0.0
        %808 = vmatprep.subr.mxu0 0.0
        %809 = vmatpush1.msra.mxu0 0.0
        %810 = vmatprep.subr.mxu0 0.0
        %811 = vmatpush1.msra.mxu0 0.0
        %812 = vmatprep.subr.mxu0 0.0
        %813 = vmatpush1.msra.mxu0 0.0
        %814 = vmatprep.subr.mxu0 0.0
        %815 = vmatpush1.msra.mxu0 0.0
        %816 = vmatprep.subr.mxu0 0.0
        %817 = vmatpush1.msra.mxu0 0.0
        %818 = vmatprep.subr.mxu0 0.0
        %819 = vmatpush1.msra.mxu0 0.0
        %820 = vmatprep.subr.mxu0 0.0
        %821 = vmatpush1.msra.mxu0 0.0
        %822 = vmatprep.subr.mxu0 0.0
        %823 = vmatpush1.msra.mxu0 0.0
        %824 = vmatprep.subr.mxu0 0.0
        %825 = vmatpush1.msra.mxu0 0.0
        %826 = vmatprep.subr.mxu0 0.0
        %827 = vmatpush1.msra.mxu0 0.0
        %828 = vmatprep.subr.mxu0 0.0
        %829 = vmatpush1.msra.mxu0 0.0
        %830 = vmatprep.subr.mxu0 0.0
        %831 = vmatpush1.msra.mxu0 0.0
        %832 = vmatprep.subr.mxu0 0.0
        %833 = vmatpush1.msra.mxu0 0.0
        %834 = vmatprep.subr.mxu0 0.0
        %835 = vmatpush1.msra.mxu0 0.0
        %836 = vmatprep.subr.mxu0 0.0
        %837 = vmatpush1.msra.mxu0 0.0
        %838 = vmatprep.mubr.f32.mxu0 0.0
        %839 = vmatmul.mubr.f32.gmra.mrb[0].mxu0 %v772
        %v840 = vpop.f32.mrb[0].mxu0
        %v841 = vadd.f32 %v769, %v840
        %v842 = vpop.f32.mrb[0].mxu0
        %843 = vdwg.mxu0
        %v844 = vld [vmem:[%s585] sm:$0x3]
        %vm845 = vnez %v844
        %vm846 = vcmask 64512
        %v848 = vsel %vm846, %v673, 0
        %v851 = vsel %vm846, %v757, 0
        %853 = vmatprep.subr.mxu0 0.0
        %854 = vmatpush1.xpose.msra.mxu0 %v851
        %855 = vmatprep.subr.mxu0 0.0
        %856 = vmatpush1.xpose.msra.mxu0 0.0
        %857 = vmatprep.subr.mxu0 0.0
        %858 = vmatpush1.xpose.msra.mxu0 0.0
        %859 = vmatprep.subr.mxu0 0.0
        %860 = vmatpush1.xpose.msra.mxu0 0.0
        %861 = vmatprep.subr.mxu0 0.0
        %862 = vmatpush1.xpose.msra.mxu0 0.0
        %863 = vmatprep.subr.mxu0 0.0
        %864 = vmatpush1.xpose.msra.mxu0 0.0
        %865 = vmatprep.subr.mxu0 0.0
        %866 = vmatpush1.xpose.msra.mxu0 0.0
        %867 = vmatprep.subr.mxu0 0.0
        %868 = vmatpush1.xpose.msra.mxu0 0.0
        %869 = vmatprep.subr.mxu0 0.0
        %870 = vmatpush1.xpose.msra.mxu0 0.0
        %871 = vmatprep.subr.mxu0 0.0
        %872 = vmatpush1.xpose.msra.mxu0 0.0
        %873 = vmatprep.subr.mxu0 0.0
        %874 = vmatpush1.xpose.msra.mxu0 0.0
        %875 = vmatprep.subr.mxu0 0.0
        %876 = vmatpush1.xpose.msra.mxu0 0.0
        %877 = vmatprep.subr.mxu0 0.0
        %878 = vmatpush1.xpose.msra.mxu0 0.0
        %879 = vmatprep.subr.mxu0 0.0
        %880 = vmatpush1.xpose.msra.mxu0 0.0
        %881 = vmatprep.subr.mxu0 0.0
        %882 = vmatpush1.xpose.msra.mxu0 0.0
        %883 = vmatprep.subr.mxu0 0.0
        %884 = vmatpush1.xpose.msra.mxu0 0.0
        %885 = vmatprep.subr.mxu0 0.0
        %886 = vmatpush1.xpose.msra.mxu0 0.0
        %887 = vmatprep.subr.mxu0 0.0
        %888 = vmatpush1.xpose.msra.mxu0 0.0
        %889 = vmatprep.subr.mxu0 0.0
        %890 = vmatpush1.xpose.msra.mxu0 0.0
        %891 = vmatprep.subr.mxu0 0.0
        %892 = vmatpush1.xpose.msra.mxu0 0.0
        %893 = vmatprep.subr.mxu0 0.0
        %894 = vmatpush1.xpose.msra.mxu0 0.0
        %895 = vmatprep.subr.mxu0 0.0
        %896 = vmatpush1.xpose.msra.mxu0 0.0
        %897 = vmatprep.subr.mxu0 0.0
        %898 = vmatpush1.xpose.msra.mxu0 0.0
        %899 = vmatprep.subr.mxu0 0.0
        %900 = vmatpush1.xpose.msra.mxu0 0.0
        %901 = vmatprep.subr.mxu0 0.0
        %902 = vmatpush1.xpose.msra.mxu0 0.0
        %903 = vmatprep.subr.mxu0 0.0
        %904 = vmatpush1.xpose.msra.mxu0 0.0
        %905 = vmatprep.subr.mxu0 0.0
        %906 = vmatpush1.xpose.msra.mxu0 0.0
        %907 = vmatprep.subr.mxu0 0.0
        %908 = vmatpush1.xpose.msra.mxu0 0.0
        %909 = vmatprep.subr.mxu0 0.0
        %910 = vmatpush1.xpose.msra.mxu0 0.0
        %911 = vmatprep.subr.mxu0 0.0
        %912 = vmatpush1.xpose.msra.mxu0 0.0
        %913 = vmatprep.subr.mxu0 0.0
        %914 = vmatpush1.xpose.msra.mxu0 0.0
        %915 = vmatprep.subr.mxu0 0.0
        %916 = vmatpush1.xpose.msra.mxu0 0.0
        %917 = vmatprep.mubr.f32.mxu0 0.0
        %918 = vmatmul.mubr.f32.gmra.mrb[0].mxu0 %v848
        %v919 = vpop.f32.mrb[0].mxu0
        %v920 = vadd.f32 0.0, %v919
        %v921 = vpop.f32.mrb[0].mxu0
        %922 = vdwg.mxu0
        %v923 = vmul.f32 %v920, 0.35355338
        %v924 = vsel %vm845, 16843009, 0
        %v925 = vunpack.c.0.s8 %v924
        %vm926 = vcmp.ne.s32.totalorder %v925, 0
        %v927 = vsel %vm926, -1e+09, %v923
        %v928 = vsel %vm846, %v927, -inf
        %929 = vmax.xlane.f32.xlu0 %v928
        %v930 = vpop.xlane.xlu0 %929
        %v931 = vsub.f32 %v927, %v930
        %v932 = vmul.f32 %v931, 1.442695
        %v933 = vpow.pop %v932
        %v934 = vsel %vm846, %v933, 0.0
        %935 = vadd.xlane.f32.xlu0 %v934
        %v936 = vpop.xlane.xlu0 %935
        %v937 = vrcp.pop %v936
        %v938 = vmul.f32 %v933, %v937
        %v940 = vsel %vm846, %v938, 0
        %942 = vmatprep.subr.mxu0 0.0
        %943 = vmatpush1.msra.mxu0 %v841
        %944 = vmatprep.subr.mxu0 0.0
        %945 = vmatpush1.msra.mxu0 0.0
        %946 = vmatprep.subr.mxu0 0.0
        %947 = vmatpush1.msra.mxu0 0.0
        %948 = vmatprep.subr.mxu0 0.0
        %949 = vmatpush1.msra.mxu0 0.0
        %950 = vmatprep.subr.mxu0 0.0
        %951 = vmatpush1.msra.mxu0 0.0
        %952 = vmatprep.subr.mxu0 0.0
        %953 = vmatpush1.msra.mxu0 0.0
        %954 = vmatprep.subr.mxu0 0.0
        %955 = vmatpush1.msra.mxu0 0.0
        %956 = vmatprep.subr.mxu0 0.0
        %957 = vmatpush1.msra.mxu0 0.0
        %958 = vmatprep.subr.mxu0 0.0
        %959 = vmatpush1.msra.mxu0 0.0
        %960 = vmatprep.subr.mxu0 0.0
        %961 = vmatpush1.msra.mxu0 0.0
        %962 = vmatprep.subr.mxu0 0.0
        %963 = vmatpush1.msra.mxu0 0.0
        %964 = vmatprep.subr.mxu0 0.0
        %965 = vmatpush1.msra.mxu0 0.0
        %966 = vmatprep.subr.mxu0 0.0
        %967 = vmatpush1.msra.mxu0 0.0
        %968 = vmatprep.subr.mxu0 0.0
        %969 = vmatpush1.msra.mxu0 0.0
        %970 = vmatprep.subr.mxu0 0.0
        %971 = vmatpush1.msra.mxu0 0.0
        %972 = vmatprep.subr.mxu0 0.0
        %973 = vmatpush1.msra.mxu0 0.0
        %974 = vmatprep.subr.mxu0 0.0
        %975 = vmatpush1.msra.mxu0 0.0
        %976 = vmatprep.subr.mxu0 0.0
        %977 = vmatpush1.msra.mxu0 0.0
        %978 = vmatprep.subr.mxu0 0.0
        %979 = vmatpush1.msra.mxu0 0.0
        %980 = vmatprep.subr.mxu0 0.0
        %981 = vmatpush1.msra.mxu0 0.0
        %982 = vmatprep.subr.mxu0 0.0
        %983 = vmatpush1.msra.mxu0 0.0
        %984 = vmatprep.subr.mxu0 0.0
        %985 = vmatpush1.msra.mxu0 0.0
        %986 = vmatprep.subr.mxu0 0.0
        %987 = vmatpush1.msra.mxu0 0.0
        %988 = vmatprep.subr.mxu0 0.0
        %989 = vmatpush1.msra.mxu0 0.0
        %990 = vmatprep.subr.mxu0 0.0
        %991 = vmatpush1.msra.mxu0 0.0
        %992 = vmatprep.subr.mxu0 0.0
        %993 = vmatpush1.msra.mxu0 0.0
        %994 = vmatprep.subr.mxu0 0.0
        %995 = vmatpush1.msra.mxu0 0.0
        %996 = vmatprep.subr.mxu0 0.0
        %997 = vmatpush1.msra.mxu0 0.0
        %998 = vmatprep.subr.mxu0 0.0
        %999 = vmatpush1.msra.mxu0 0.0
        %1000 = vmatprep.subr.mxu0 0.0
        %1001 = vmatpush1.msra.mxu0 0.0
        %1002 = vmatprep.subr.mxu0 0.0
        %1003 = vmatpush1.msra.mxu0 0.0
        %1004 = vmatprep.subr.mxu0 0.0
        %1005 = vmatpush1.msra.mxu0 0.0
        %1006 = vmatprep.mubr.f32.mxu0 0.0
        %1007 = vmatmul.mubr.f32.gmra.mrb[0].mxu0 %v940
        %v1008 = vpop.f32.mrb[0].mxu0
        %v1009 = vadd.f32 0.0, %v1008
        %v1010 = vpop.f32.mrb[0].mxu0
        %1011 = vdwg.mxu0
        %1012 = vrot.lane.b32.xlu0 %v673, 120
        %v1013 = vpop.permute.xlu0 %1012
        %1014 = vrot.lane.b32.xlu0 %v757, 120
        %v1015 = vpop.permute.xlu0 %1014
        %v1016 = vsel %vm846, %v1013, 0
        %v1018 = vsel %vm846, %v1015, 0
        %1020 = vmatprep.subr.mxu0 0.0
        %1021 = vmatpush1.xpose.msra.mxu0 %v1018
        %1022 = vmatprep.subr.mxu0 0.0
        %1023 = vmatpush1.xpose.msra.mxu0 0.0
        %1024 = vmatprep.subr.mxu0 0.0
        %1025 = vmatpush1.xpose.msra.mxu0 0.0
        %1026 = vmatprep.subr.mxu0 0.0
        %1027 = vmatpush1.xpose.msra.mxu0 0.0
        %1028 = vmatprep.subr.mxu0 0.0
        %1029 = vmatpush1.xpose.msra.mxu0 0.0
        %1030 = vmatprep.subr.mxu0 0.0
        %1031 = vmatpush1.xpose.msra.mxu0 0.0
        %1032 = vmatprep.subr.mxu0 0.0
        %1033 = vmatpush1.xpose.msra.mxu0 0.0
        %1034 = vmatprep.subr.mxu0 0.0
        %1035 = vmatpush1.xpose.msra.mxu0 0.0
        %1036 = vmatprep.subr.mxu0 0.0
        %1037 = vmatpush1.xpose.msra.mxu0 0.0
        %1038 = vmatprep.subr.mxu0 0.0
        %1039 = vmatpush1.xpose.msra.mxu0 0.0
        %1040 = vmatprep.subr.mxu0 0.0
        %1041 = vmatpush1.xpose.msra.mxu0 0.0
        %1042 = vmatprep.subr.mxu0 0.0
        %1043 = vmatpush1.xpose.msra.mxu0 0.0
        %1044 = vmatprep.subr.mxu0 0.0
        %1045 = vmatpush1.xpose.msra.mxu0 0.0
        %1046 = vmatprep.subr.mxu0 0.0
        %1047 = vmatpush1.xpose.msra.mxu0 0.0
        %1048 = vmatprep.subr.mxu0 0.0
        %1049 = vmatpush1.xpose.msra.mxu0 0.0
        %1050 = vmatprep.subr.mxu0 0.0
        %1051 = vmatpush1.xpose.msra.mxu0 0.0
        %1052 = vmatprep.subr.mxu0 0.0
        %1053 = vmatpush1.xpose.msra.mxu0 0.0
        %1054 = vmatprep.subr.mxu0 0.0
        %1055 = vmatpush1.xpose.msra.mxu0 0.0
        %1056 = vmatprep.subr.mxu0 0.0
        %1057 = vmatpush1.xpose.msra.mxu0 0.0
        %1058 = vmatprep.subr.mxu0 0.0
        %1059 = vmatpush1.xpose.msra.mxu0 0.0
        %1060 = vmatprep.subr.mxu0 0.0
        %1061 = vmatpush1.xpose.msra.mxu0 0.0
        %1062 = vmatprep.subr.mxu0 0.0
        %1063 = vmatpush1.xpose.msra.mxu0 0.0
        %1064 = vmatprep.subr.mxu0 0.0
        %1065 = vmatpush1.xpose.msra.mxu0 0.0
        %1066 = vmatprep.subr.mxu0 0.0
        %1067 = vmatpush1.xpose.msra.mxu0 0.0
        %1068 = vmatprep.subr.mxu0 0.0
        %1069 = vmatpush1.xpose.msra.mxu0 0.0
        %1070 = vmatprep.subr.mxu0 0.0
        %1071 = vmatpush1.xpose.msra.mxu0 0.0
        %1072 = vmatprep.subr.mxu0 0.0
        %1073 = vmatpush1.xpose.msra.mxu0 0.0
        %1074 = vmatprep.subr.mxu0 0.0
        %1075 = vmatpush1.xpose.msra.mxu0 0.0
        %1076 = vmatprep.subr.mxu0 0.0
        %1077 = vmatpush1.xpose.msra.mxu0 0.0
        %1078 = vmatprep.subr.mxu0 0.0
        %1079 = vmatpush1.xpose.msra.mxu0 0.0
        %1080 = vmatprep.subr.mxu0 0.0
        %1081 = vmatpush1.xpose.msra.mxu0 0.0
        %1082 = vmatprep.subr.mxu0 0.0
        %1083 = vmatpush1.xpose.msra.mxu0 0.0
        %1084 = vmatprep.mubr.f32.mxu0 0.0
        %1085 = vmatmul.mubr.f32.gmra.mrb[0].mxu0 %v1016
        %v1086 = vpop.f32.mrb[0].mxu0
        %v1087 = vadd.f32 0.0, %v1086
        %v1088 = vpop.f32.mrb[0].mxu0
        %1089 = vdwg.mxu0
        %v1090 = vmul.f32 %v1087, 0.35355338
        %v1091 = vsel %vm926, -1e+09, %v1090
        %v1092 = vsel %vm846, %v1091, -inf
        %1093 = vmax.xlane.f32.xlu0 %v1092
        %v1094 = vpop.xlane.xlu0 %1093
        %v1095 = vsub.f32 %v1091, %v1094
        %v1096 = vmul.f32 %v1095, 1.442695
        %v1097 = vpow.pop %v1096
        %v1098 = vsel %vm846, %v1097, 0.0
        %1099 = vadd.xlane.f32.xlu0 %v1098
        %v1100 = vpop.xlane.xlu0 %1099
        %v1101 = vrcp.pop %v1100
        %v1102 = vmul.f32 %v1097, %v1101
        %1104 = vrot.lane.b32.xlu0 %v841, 120
        %v1105 = vpop.permute.xlu0 %1104
        %v1108 = vsel %vm846, %v1102, 0
        %1110 = vmatprep.subr.mxu0 0.0
        %1111 = vmatpush1.msra.mxu0 %v1105
        %1112 = vmatprep.subr.mxu0 0.0
        %1113 = vmatpush1.msra.mxu0 0.0
        %1114 = vmatprep.subr.mxu0 0.0
        %1115 = vmatpush1.msra.mxu0 0.0
        %1116 = vmatprep.subr.mxu0 0.0
        %1117 = vmatpush1.msra.mxu0 0.0
        %1118 = vmatprep.subr.mxu0 0.0
        %1119 = vmatpush1.msra.mxu0 0.0
        %1120 = vmatprep.subr.mxu0 0.0
        %1121 = vmatpush1.msra.mxu0 0.0
        %1122 = vmatprep.subr.mxu0 0.0
        %1123 = vmatpush1.msra.mxu0 0.0
        %1124 = vmatprep.subr.mxu0 0.0
        %1125 = vmatpush1.msra.mxu0 0.0
        %1126 = vmatprep.subr.mxu0 0.0
        %1127 = vmatpush1.msra.mxu0 0.0
        %1128 = vmatprep.subr.mxu0 0.0
        %1129 = vmatpush1.msra.mxu0 0.0
        %1130 = vmatprep.subr.mxu0 0.0
        %1131 = vmatpush1.msra.mxu0 0.0
        %1132 = vmatprep.subr.mxu0 0.0
        %1133 = vmatpush1.msra.mxu0 0.0
        %1134 = vmatprep.subr.mxu0 0.0
        %1135 = vmatpush1.msra.mxu0 0.0
        %1136 = vmatprep.subr.mxu0 0.0
        %1137 = vmatpush1.msra.mxu0 0.0
        %1138 = vmatprep.subr.mxu0 0.0
        %1139 = vmatpush1.msra.mxu0 0.0
        %1140 = vmatprep.subr.mxu0 0.0
        %1141 = vmatpush1.msra.mxu0 0.0
        %1142 = vmatprep.subr.mxu0 0.0
        %1143 = vmatpush1.msra.mxu0 0.0
        %1144 = vmatprep.subr.mxu0 0.0
        %1145 = vmatpush1.msra.mxu0 0.0
        %1146 = vmatprep.subr.mxu0 0.0
        %1147 = vmatpush1.msra.mxu0 0.0
        %1148 = vmatprep.subr.mxu0 0.0
        %1149 = vmatpush1.msra.mxu0 0.0
        %1150 = vmatprep.subr.mxu0 0.0
        %1151 = vmatpush1.msra.mxu0 0.0
        %1152 = vmatprep.subr.mxu0 0.0
        %1153 = vmatpush1.msra.mxu0 0.0
        %1154 = vmatprep.subr.mxu0 0.0
        %1155 = vmatpush1.msra.mxu0 0.0
        %1156 = vmatprep.subr.mxu0 0.0
        %1157 = vmatpush1.msra.mxu0 0.0
        %1158 = vmatprep.subr.mxu0 0.0
        %1159 = vmatpush1.msra.mxu0 0.0
        %1160 = vmatprep.subr.mxu0 0.0
        %1161 = vmatpush1.msra.mxu0 0.0
        %1162 = vmatprep.subr.mxu0 0.0
        %1163 = vmatpush1.msra.mxu0 0.0
        %1164 = vmatprep.subr.mxu0 0.0
        %1165 = vmatpush1.msra.mxu0 0.0
        %1166 = vmatprep.subr.mxu0 0.0
        %1167 = vmatpush1.msra.mxu0 0.0
        %1168 = vmatprep.subr.mxu0 0.0
        %1169 = vmatpush1.msra.mxu0 0.0
        %1170 = vmatprep.subr.mxu0 0.0
        %1171 = vmatpush1.msra.mxu0 0.0
        %1172 = vmatprep.subr.mxu0 0.0
        %1173 = vmatpush1.msra.mxu0 0.0
        %1174 = vmatprep.mubr.f32.mxu0 0.0
        %1175 = vmatmul.mubr.f32.gmra.mrb[0].mxu0 %v1108
        %v1176 = vpop.f32.mrb[0].mxu0
        %v1177 = vadd.f32 0.0, %v1176
        %v1178 = vpop.f32.mrb[0].mxu0
        %1179 = vdwg.mxu0
        %1180 = vrot.lane.b32.xlu0 %v673, 112
        %v1181 = vpop.permute.xlu0 %1180
        %1182 = vrot.lane.b32.xlu0 %v757, 112
        %v1183 = vpop.permute.xlu0 %1182
        %v1184 = vsel %vm846, %v1181, 0
        %v1186 = vsel %vm846, %v1183, 0
        %1188 = vmatprep.subr.mxu0 0.0
        %1189 = vmatpush1.xpose.msra.mxu0 %v1186
        %1190 = vmatprep.subr.mxu0 0.0
        %1191 = vmatpush1.xpose.msra.mxu0 0.0
        %1192 = vmatprep.subr.mxu0 0.0
        %1193 = vmatpush1.xpose.msra.mxu0 0.0
        %1194 = vmatprep.subr.mxu0 0.0
        %1195 = vmatpush1.xpose.msra.mxu0 0.0
        %1196 = vmatprep.subr.mxu0 0.0
        %1197 = vmatpush1.xpose.msra.mxu0 0.0
        %1198 = vmatprep.subr.mxu0 0.0
        %1199 = vmatpush1.xpose.msra.mxu0 0.0
        %1200 = vmatprep.subr.mxu0 0.0
        %1201 = vmatpush1.xpose.msra.mxu0 0.0
        %1202 = vmatprep.subr.mxu0 0.0
        %1203 = vmatpush1.xpose.msra.mxu0 0.0
        %1204 = vmatprep.subr.mxu0 0.0
        %1205 = vmatpush1.xpose.msra.mxu0 0.0
        %1206 = vmatprep.subr.mxu0 0.0
        %1207 = vmatpush1.xpose.msra.mxu0 0.0
        %1208 = vmatprep.subr.mxu0 0.0
        %1209 = vmatpush1.xpose.msra.mxu0 0.0
        %1210 = vmatprep.subr.mxu0 0.0
        %1211 = vmatpush1.xpose.msra.mxu0 0.0
        %1212 = vmatprep.subr.mxu0 0.0
        %1213 = vmatpush1.xpose.msra.mxu0 0.0
        %1214 = vmatprep.subr.mxu0 0.0
        %1215 = vmatpush1.xpose.msra.mxu0 0.0
        %1216 = vmatprep.subr.mxu0 0.0
        %1217 = vmatpush1.xpose.msra.mxu0 0.0
        %1218 = vmatprep.subr.mxu0 0.0
        %1219 = vmatpush1.xpose.msra.mxu0 0.0
        %1220 = vmatprep.subr.mxu0 0.0
        %1221 = vmatpush1.xpose.msra.mxu0 0.0
        %1222 = vmatprep.subr.mxu0 0.0
        %1223 = vmatpush1.xpose.msra.mxu0 0.0
        %1224 = vmatprep.subr.mxu0 0.0
        %1225 = vmatpush1.xpose.msra.mxu0 0.0
        %1226 = vmatprep.subr.mxu0 0.0
        %1227 = vmatpush1.xpose.msra.mxu0 0.0
        %1228 = vmatprep.subr.mxu0 0.0
        %1229 = vmatpush1.xpose.msra.mxu0 0.0
        %1230 = vmatprep.subr.mxu0 0.0
        %1231 = vmatpush1.xpose.msra.mxu0 0.0
        %1232 = vmatprep.subr.mxu0 0.0
        %1233 = vmatpush1.xpose.msra.mxu0 0.0
        %1234 = vmatprep.subr.mxu0 0.0
        %1235 = vmatpush1.xpose.msra.mxu0 0.0
        %1236 = vmatprep.subr.mxu0 0.0
        %1237 = vmatpush1.xpose.msra.mxu0 0.0
        %1238 = vmatprep.subr.mxu0 0.0
        %1239 = vmatpush1.xpose.msra.mxu0 0.0
        %1240 = vmatprep.subr.mxu0 0.0
        %1241 = vmatpush1.xpose.msra.mxu0 0.0
        %1242 = vmatprep.subr.mxu0 0.0
        %1243 = vmatpush1.xpose.msra.mxu0 0.0
        %1244 = vmatprep.subr.mxu0 0.0
        %1245 = vmatpush1.xpose.msra.mxu0 0.0
        %1246 = vmatprep.subr.mxu0 0.0
        %1247 = vmatpush1.xpose.msra.mxu0 0.0
        %1248 = vmatprep.subr.mxu0 0.0
        %1249 = vmatpush1.xpose.msra.mxu0 0.0
        %1250 = vmatprep.subr.mxu0 0.0
        %1251 = vmatpush1.xpose.msra.mxu0 0.0
        %1252 = vmatprep.mubr.f32.mxu0 0.0
        %1253 = vmatmul.mubr.f32.gmra.mrb[0].mxu0 %v1184
        %v1254 = vpop.f32.mrb[0].mxu0
        %v1255 = vadd.f32 0.0, %v1254
        %v1256 = vpop.f32.mrb[0].mxu0
        %1257 = vdwg.mxu0
        %v1258 = vmul.f32 %v1255, 0.35355338
        %v1259 = vsel %vm926, -1e+09, %v1258
        %v1260 = vsel %vm846, %v1259, -inf
        %1261 = vmax.xlane.f32.xlu0 %v1260
        %v1262 = vpop.xlane.xlu0 %1261
        %v1263 = vsub.f32 %v1259, %v1262
        %v1264 = vmul.f32 %v1263, 1.442695
        %v1265 = vpow.pop %v1264
        %v1266 = vsel %vm846, %v1265, 0.0
        %1267 = vadd.xlane.f32.xlu0 %v1266
        %v1268 = vpop.xlane.xlu0 %1267
        %v1269 = vrcp.pop %v1268
        %v1270 = vmul.f32 %v1265, %v1269
        %1271 = vrot.lane.b32.xlu0 %v841, 112
        %v1272 = vpop.permute.xlu0 %1271
        %v1275 = vsel %vm846, %v1270, 0
        %1277 = vmatprep.subr.mxu0 0.0
        %1278 = vmatpush1.msra.mxu0 %v1272
        %1279 = vmatprep.subr.mxu0 0.0
        %1280 = vmatpush1.msra.mxu0 0.0
        %1281 = vmatprep.subr.mxu0 0.0
        %1282 = vmatpush1.msra.mxu0 0.0
        %1283 = vmatprep.subr.mxu0 0.0
        %1284 = vmatpush1.msra.mxu0 0.0
        %1285 = vmatprep.subr.mxu0 0.0
        %1286 = vmatpush1.msra.mxu0 0.0
        %1287 = vmatprep.subr.mxu0 0.0
        %1288 = vmatpush1.msra.mxu0 0.0
        %1289 = vmatprep.subr.mxu0 0.0
        %1290 = vmatpush1.msra.mxu0 0.0
        %1291 = vmatprep.subr.mxu0 0.0
        %1292 = vmatpush1.msra.mxu0 0.0
        %1293 = vmatprep.subr.mxu0 0.0
        %1294 = vmatpush1.msra.mxu0 0.0
        %1295 = vmatprep.subr.mxu0 0.0
        %1296 = vmatpush1.msra.mxu0 0.0
        %1297 = vmatprep.subr.mxu0 0.0
        %1298 = vmatpush1.msra.mxu0 0.0
        %1299 = vmatprep.subr.mxu0 0.0
        %1300 = vmatpush1.msra.mxu0 0.0
        %1301 = vmatprep.subr.mxu0 0.0
        %1302 = vmatpush1.msra.mxu0 0.0
        %1303 = vmatprep.subr.mxu0 0.0
        %1304 = vmatpush1.msra.mxu0 0.0
        %1305 = vmatprep.subr.mxu0 0.0
        %1306 = vmatpush1.msra.mxu0 0.0
        %1307 = vmatprep.subr.mxu0 0.0
        %1308 = vmatpush1.msra.mxu0 0.0
        %1309 = vmatprep.subr.mxu0 0.0
        %1310 = vmatpush1.msra.mxu0 0.0
        %1311 = vmatprep.subr.mxu0 0.0
        %1312 = vmatpush1.msra.mxu0 0.0
        %1313 = vmatprep.subr.mxu0 0.0
        %1314 = vmatpush1.msra.mxu0 0.0
        %1315 = vmatprep.subr.mxu0 0.0
        %1316 = vmatpush1.msra.mxu0 0.0
        %1317 = vmatprep.subr.mxu0 0.0
        %1318 = vmatpush1.msra.mxu0 0.0
        %1319 = vmatprep.subr.mxu0 0.0
        %1320 = vmatpush1.msra.mxu0 0.0
        %1321 = vmatprep.subr.mxu0 0.0
        %1322 = vmatpush1.msra.mxu0 0.0
        %1323 = vmatprep.subr.mxu0 0.0
        %1324 = vmatpush1.msra.mxu0 0.0
        %1325 = vmatprep.subr.mxu0 0.0
        %1326 = vmatpush1.msra.mxu0 0.0
        %1327 = vmatprep.subr.mxu0 0.0
        %1328 = vmatpush1.msra.mxu0 0.0
        %1329 = vmatprep.subr.mxu0 0.0
        %1330 = vmatpush1.msra.mxu0 0.0
        %1331 = vmatprep.subr.mxu0 0.0
        %1332 = vmatpush1.msra.mxu0 0.0
        %1333 = vmatprep.subr.mxu0 0.0
        %1334 = vmatpush1.msra.mxu0 0.0
        %1335 = vmatprep.subr.mxu0 0.0
        %1336 = vmatpush1.msra.mxu0 0.0
        %1337 = vmatprep.subr.mxu0 0.0
        %1338 = vmatpush1.msra.mxu0 0.0
        %1339 = vmatprep.subr.mxu0 0.0
        %1340 = vmatpush1.msra.mxu0 0.0
        %1341 = vmatprep.mubr.f32.mxu0 0.0
        %1342 = vmatmul.mubr.f32.gmra.mrb[0].mxu0 %v1275
        %v1343 = vpop.f32.mrb[0].mxu0
        %v1344 = vadd.f32 0.0, %v1343
        %v1345 = vpop.f32.mrb[0].mxu0
        %1346 = vdwg.mxu0
        %1347 = vrot.lane.b32.xlu0 %v673, 104
        %v1348 = vpop.permute.xlu0 %1347
        %1349 = vrot.lane.b32.xlu0 %v757, 104
        %v1350 = vpop.permute.xlu0 %1349
        %v1351 = vsel %vm846, %v1348, 0
        %v1353 = vsel %vm846, %v1350, 0
        %1355 = vmatprep.subr.mxu0 0.0
        %1356 = vmatpush1.xpose.msra.mxu0 %v1353
        %1357 = vmatprep.subr.mxu0 0.0
        %1358 = vmatpush1.xpose.msra.mxu0 0.0
        %1359 = vmatprep.subr.mxu0 0.0
        %1360 = vmatpush1.xpose.msra.mxu0 0.0
        %1361 = vmatprep.subr.mxu0 0.0
        %1362 = vmatpush1.xpose.msra.mxu0 0.0
        %1363 = vmatprep.subr.mxu0 0.0
        %1364 = vmatpush1.xpose.msra.mxu0 0.0
        %1365 = vmatprep.subr.mxu0 0.0
        %1366 = vmatpush1.xpose.msra.mxu0 0.0
        %1367 = vmatprep.subr.mxu0 0.0
        %1368 = vmatpush1.xpose.msra.mxu0 0.0
        %1369 = vmatprep.subr.mxu0 0.0
        %1370 = vmatpush1.xpose.msra.mxu0 0.0
        %1371 = vmatprep.subr.mxu0 0.0
        %1372 = vmatpush1.xpose.msra.mxu0 0.0
        %1373 = vmatprep.subr.mxu0 0.0
        %1374 = vmatpush1.xpose.msra.mxu0 0.0
        %1375 = vmatprep.subr.mxu0 0.0
        %1376 = vmatpush1.xpose.msra.mxu0 0.0
        %1377 = vmatprep.subr.mxu0 0.0
        %1378 = vmatpush1.xpose.msra.mxu0 0.0
        %1379 = vmatprep.subr.mxu0 0.0
        %1380 = vmatpush1.xpose.msra.mxu0 0.0
        %1381 = vmatprep.subr.mxu0 0.0
        %1382 = vmatpush1.xpose.msra.mxu0 0.0
        %1383 = vmatprep.subr.mxu0 0.0
        %1384 = vmatpush1.xpose.msra.mxu0 0.0
        %1385 = vmatprep.subr.mxu0 0.0
        %1386 = vmatpush1.xpose.msra.mxu0 0.0
        %1387 = vmatprep.subr.mxu0 0.0
        %1388 = vmatpush1.xpose.msra.mxu0 0.0
        %1389 = vmatprep.subr.mxu0 0.0
        %1390 = vmatpush1.xpose.msra.mxu0 0.0
        %1391 = vmatprep.subr.mxu0 0.0
        %1392 = vmatpush1.xpose.msra.mxu0 0.0
        %1393 = vmatprep.subr.mxu0 0.0
        %1394 = vmatpush1.xpose.msra.mxu0 0.0
        %1395 = vmatprep.subr.mxu0 0.0
        %1396 = vmatpush1.xpose.msra.mxu0 0.0
        %1397 = vmatprep.subr.mxu0 0.0
        %1398 = vmatpush1.xpose.msra.mxu0 0.0
        %1399 = vmatprep.subr.mxu0 0.0
        %1400 = vmatpush1.xpose.msra.mxu0 0.0
        %1401 = vmatprep.subr.mxu0 0.0
        %1402 = vmatpush1.xpose.msra.mxu0 0.0
        %1403 = vmatprep.subr.mxu0 0.0
        %1404 = vmatpush1.xpose.msra.mxu0 0.0
        %1405 = vmatprep.subr.mxu0 0.0
        %1406 = vmatpush1.xpose.msra.mxu0 0.0
        %1407 = vmatprep.subr.mxu0 0.0
        %1408 = vmatpush1.xpose.msra.mxu0 0.0
        %1409 = vmatprep.subr.mxu0 0.0
        %1410 = vmatpush1.xpose.msra.mxu0 0.0
        %1411 = vmatprep.subr.mxu0 0.0
        %1412 = vmatpush1.xpose.msra.mxu0 0.0
        %1413 = vmatprep.subr.mxu0 0.0
        %1414 = vmatpush1.xpose.msra.mxu0 0.0
        %1415 = vmatprep.subr.mxu0 0.0
        %1416 = vmatpush1.xpose.msra.mxu0 0.0
        %1417 = vmatprep.subr.mxu0 0.0
        %1418 = vmatpush1.xpose.msra.mxu0 0.0
        %1419 = vmatprep.mubr.f32.mxu0 0.0
        %1420 = vmatmul.mubr.f32.gmra.mrb[0].mxu0 %v1351
        %v1421 = vpop.f32.mrb[0].mxu0
        %v1422 = vadd.f32 0.0, %v1421
        %v1423 = vpop.f32.mrb[0].mxu0
        %1424 = vdwg.mxu0
        %v1425 = vmul.f32 %v1422, 0.35355338
        %v1426 = vsel %vm926, -1e+09, %v1425
        %v1427 = vsel %vm846, %v1426, -inf
        %1428 = vmax.xlane.f32.xlu0 %v1427
        %v1429 = vpop.xlane.xlu0 %1428
        %v1430 = vsub.f32 %v1426, %v1429
        %v1431 = vmul.f32 %v1430, 1.442695
        %v1432 = vpow.pop %v1431
        %v1433 = vsel %vm846, %v1432, 0.0
        %1434 = vadd.xlane.f32.xlu0 %v1433
        %v1435 = vpop.xlane.xlu0 %1434
        %v1436 = vrcp.pop %v1435
        %v1437 = vmul.f32 %v1432, %v1436
        %1438 = vrot.lane.b32.xlu0 %v841, 104
        %v1439 = vpop.permute.xlu0 %1438
        %v1442 = vsel %vm846, %v1437, 0
        %1444 = vmatprep.subr.mxu0 0.0
        %1445 = vmatpush1.msra.mxu0 %v1439
        %1446 = vmatprep.subr.mxu0 0.0
        %1447 = vmatpush1.msra.mxu0 0.0
        %1448 = vmatprep.subr.mxu0 0.0
        %1449 = vmatpush1.msra.mxu0 0.0
        %1450 = vmatprep.subr.mxu0 0.0
        %1451 = vmatpush1.msra.mxu0 0.0
        %1452 = vmatprep.subr.mxu0 0.0
        %1453 = vmatpush1.msra.mxu0 0.0
        %1454 = vmatprep.subr.mxu0 0.0
        %1455 = vmatpush1.msra.mxu0 0.0
        %1456 = vmatprep.subr.mxu0 0.0
        %1457 = vmatpush1.msra.mxu0 0.0
        %1458 = vmatprep.subr.mxu0 0.0
        %1459 = vmatpush1.msra.mxu0 0.0
        %1460 = vmatprep.subr.mxu0 0.0
        %1461 = vmatpush1.msra.mxu0 0.0
        %1462 = vmatprep.subr.mxu0 0.0
        %1463 = vmatpush1.msra.mxu0 0.0
        %1464 = vmatprep.subr.mxu0 0.0
        %1465 = vmatpush1.msra.mxu0 0.0
        %1466 = vmatprep.subr.mxu0 0.0
        %1467 = vmatpush1.msra.mxu0 0.0
        %1468 = vmatprep.subr.mxu0 0.0
        %1469 = vmatpush1.msra.mxu0 0.0
        %1470 = vmatprep.subr.mxu0 0.0
        %1471 = vmatpush1.msra.mxu0 0.0
        %1472 = vmatprep.subr.mxu0 0.0
        %1473 = vmatpush1.msra.mxu0 0.0
        %1474 = vmatprep.subr.mxu0 0.0
        %1475 = vmatpush1.msra.mxu0 0.0
        %1476 = vmatprep.subr.mxu0 0.0
        %1477 = vmatpush1.msra.mxu0 0.0
        %1478 = vmatprep.subr.mxu0 0.0
        %1479 = vmatpush1.msra.mxu0 0.0
        %1480 = vmatprep.subr.mxu0 0.0
        %1481 = vmatpush1.msra.mxu0 0.0
        %1482 = vmatprep.subr.mxu0 0.0
        %1483 = vmatpush1.msra.mxu0 0.0
        %1484 = vmatprep.subr.mxu0 0.0
        %1485 = vmatpush1.msra.mxu0 0.0
        %1486 = vmatprep.subr.mxu0 0.0
        %1487 = vmatpush1.msra.mxu0 0.0
        %1488 = vmatprep.subr.mxu0 0.0
        %1489 = vmatpush1.msra.mxu0 0.0
        %1490 = vmatprep.subr.mxu0 0.0
        %1491 = vmatpush1.msra.mxu0 0.0
        %1492 = vmatprep.subr.mxu0 0.0
        %1493 = vmatpush1.msra.mxu0 0.0
        %1494 = vmatprep.subr.mxu0 0.0
        %1495 = vmatpush1.msra.mxu0 0.0
        %1496 = vmatprep.subr.mxu0 0.0
        %1497 = vmatpush1.msra.mxu0 0.0
        %1498 = vmatprep.subr.mxu0 0.0
        %1499 = vmatpush1.msra.mxu0 0.0
        %1500 = vmatprep.subr.mxu0 0.0
        %1501 = vmatpush1.msra.mxu0 0.0
        %1502 = vmatprep.subr.mxu0 0.0
        %1503 = vmatpush1.msra.mxu0 0.0
        %1504 = vmatprep.subr.mxu0 0.0
        %1505 = vmatpush1.msra.mxu0 0.0
        %1506 = vmatprep.subr.mxu0 0.0
        %1507 = vmatpush1.msra.mxu0 0.0
        %1508 = vmatprep.mubr.f32.mxu0 0.0
        %1509 = vmatmul.mubr.f32.gmra.mrb[0].mxu0 %v1442
        %v1510 = vpop.f32.mrb[0].mxu0
        %v1511 = vadd.f32 0.0, %v1510
        %v1512 = vpop.f32.mrb[0].mxu0
        %1513 = vdwg.mxu0
        %1515 = vrot.lane.b32.xlu0 %v1177, 8
        %v1516 = vpop.permute.xlu0 %1515
        %1519 = vrot.lane.b32.xlu0 %v1344, 16
        %v1520 = vpop.permute.xlu0 %1519
        %1523 = vrot.lane.b32.xlu0 %v1511, 24
        %v1524 = vpop.permute.xlu0 %1523
        %v1526 = vsel %vm846, %v1009, %v1516
        %vm1527 = vcmask 130048
        %v1528 = vsel %vm1527, %v1526, %v1520
        %vm1529 = vcmask 195584
        %v1530 = vsel %vm1529, %v1528, %v1524
        %v1531 = vld [vmem:[%s10] sm:$0xff]
        %v1532 = vld [vmem:[%s10 + $0x8] sm:$0xff]
        %v1533 = vld [vmem:[%s10 + $0x10] sm:$0xff]
        %v1534 = vld [vmem:[%s10 + $0x18] sm:$0xff]
        %v1535 = vld [vmem:[%s11] sm:$0x1]
        %v1537 = vlaneseq
        %v1538 = vshrl.u32 %v1537, 7
        %v1539 = vsub.s32 0, %v1538
        %v1540 = vrot.slane %v1535, %v1539
        %v1543 = vsel %vm602, %v1530, 0
        %1545 = vmatprep.subr.mxu0 0.0
        %1546 = vmatpush1.msra.mxu0 %v1531
        %1547 = vmatprep.subr.mxu0 0.0
        %1548 = vmatpush1.msra.mxu0 %v1532
        %1549 = vmatprep.subr.mxu0 0.0
        %1550 = vmatpush1.msra.mxu0 %v1533
        %1551 = vmatprep.subr.mxu0 0.0
        %1552 = vmatpush1.msra.mxu0 %v1534
        %1553 = vmatprep.subr.mxu0 0.0
        %1554 = vmatpush1.msra.mxu0 0.0
        %1555 = vmatprep.subr.mxu0 0.0
        %1556 = vmatpush1.msra.mxu0 0.0
        %1557 = vmatprep.subr.mxu0 0.0
        %1558 = vmatpush1.msra.mxu0 0.0
        %1559 = vmatprep.subr.mxu0 0.0
        %1560 = vmatpush1.msra.mxu0 0.0
        %1561 = vmatprep.subr.mxu0 0.0
        %1562 = vmatpush1.msra.mxu0 0.0
        %1563 = vmatprep.subr.mxu0 0.0
        %1564 = vmatpush1.msra.mxu0 0.0
        %1565 = vmatprep.subr.mxu0 0.0
        %1566 = vmatpush1.msra.mxu0 0.0
        %1567 = vmatprep.subr.mxu0 0.0
        %1568 = vmatpush1.msra.mxu0 0.0
        %1569 = vmatprep.subr.mxu0 0.0
        %1570 = vmatpush1.msra.mxu0 0.0
        %1571 = vmatprep.subr.mxu0 0.0
        %1572 = vmatpush1.msra.mxu0 0.0
        %1573 = vmatprep.subr.mxu0 0.0
        %1574 = vmatpush1.msra.mxu0 0.0
        %1575 = vmatprep.subr.mxu0 0.0
        %1576 = vmatpush1.msra.mxu0 0.0
        %1577 = vmatprep.subr.mxu0 0.0
        %1578 = vmatpush1.msra.mxu0 0.0
        %1579 = vmatprep.subr.mxu0 0.0
        %1580 = vmatpush1.msra.mxu0 0.0
        %1581 = vmatprep.subr.mxu0 0.0
        %1582 = vmatpush1.msra.mxu0 0.0
        %1583 = vmatprep.subr.mxu0 0.0
        %1584 = vmatpush1.msra.mxu0 0.0
        %1585 = vmatprep.subr.mxu0 0.0
        %1586 = vmatpush1.msra.mxu0 0.0
        %1587 = vmatprep.subr.mxu0 0.0
        %1588 = vmatpush1.msra.mxu0 0.0
        %1589 = vmatprep.subr.mxu0 0.0
        %1590 = vmatpush1.msra.mxu0 0.0
        %1591 = vmatprep.subr.mxu0 0.0
        %1592 = vmatpush1.msra.mxu0 0.0
        %1593 = vmatprep.subr.mxu0 0.0
        %1594 = vmatpush1.msra.mxu0 0.0
        %1595 = vmatprep.subr.mxu0 0.0
        %1596 = vmatpush1.msra.mxu0 0.0
        %1597 = vmatprep.subr.mxu0 0.0
        %1598 = vmatpush1.msra.mxu0 0.0
        %1599 = vmatprep.subr.mxu0 0.0
        %1600 = vmatpush1.msra.mxu0 0.0
        %1601 = vmatprep.subr.mxu0 0.0
        %1602 = vmatpush1.msra.mxu0 0.0
        %1603 = vmatprep.subr.mxu0 0.0
        %1604 = vmatpush1.msra.mxu0 0.0
        %1605 = vmatprep.subr.mxu0 0.0
        %1606 = vmatpush1.msra.mxu0 0.0
        %1607 = vmatprep.subr.mxu0 0.0
        %1608 = vmatpush1.msra.mxu0 0.0
        %1609 = vmatprep.mubr.f32.mxu0 0.0
        %1610 = vmatmul.mubr.f32.gmra.mrb[0].mxu0 %v1543
        %v1611 = vpop.f32.mrb[0].mxu0
        %v1612 = vadd.f32 %v1540, %v1611
        %v1613 = vpop.f32.mrb[0].mxu0
        %1614 = vdwg.mxu0
        %1615 = vst.msk [vmem:[%s581] sm:$0xff] %vm602, %v1612
        %s1616 = sand.u32 %s315, 1
        %s1617 = scalar_lea.sflag [#allocation4], %s1616
        %s1618 = sand.u32 %s315, 1
        %s1619 = smul.addr %s1618, 8
        %s1620 = scalar_lea.vmem [#allocation16], %s1619
        // Predicated region
        $region101: #{tpu_custom_call.1} parent=67 // pred_check
          %p1621 = pneg %p325
        $region102: #{tpu_custom_call.1} parent=67 // pred_check_branch
          %1623 = sbr.rel (%p1621) target = $region104
        $region103: #{tpu_custom_call.1} parent=67 // pred_region
          %s1625 = ssub.s32 128, 128
          %1626 = vsyncadd %s1617, %s1625
          %s1627 = smul.addr %s35, 128
          %s1628 = scalar_lea.hbm %s12, %s1627
          %s1630 = sshll.u32 %s1620, 4
          %s1631 = int_to_ptr.vmem [resolvable:$true] %s1630
          %1633 = dma.vmem_to_hbm [thread:$0]  %s1631, 128, %s1628, %s1617
        $region104: #{tpu_custom_call.1} parent=67 // pred_fallthru
          _
      $region68: #{tpu_custom_call.1} parent=5 // pred_fallthru
        _
      %p1634 = scmp.le.s32.totalorder 2, %s30
      // Predicated region
      $region105: #{tpu_custom_call.1} parent=5 // pred_check
        %p1635 = pneg %p1634
      $region106: #{tpu_custom_call.1} parent=5 // pred_check_branch
        %1637 = sbr.rel (%p1635) target = $region108
      $region107: #{tpu_custom_call.1} parent=5 // pred_region
        %s1638 = ssub.s32 %s30, 2
        // Predicated region
        $region109: #{tpu_custom_call.1} parent=107 // pred_check
          %p1639 = pneg %p331
        $region110: #{tpu_custom_call.1} parent=107 // pred_check_branch
          %1641 = sbr.rel (%p1639) target = $region112
        $region111: #{tpu_custom_call.1} parent=107 // pred_region
          %s1642 = sand.u32 %s316, 1
          %s1643 = scalar_lea.sflag [#allocation4], %s1642
          %s1644 = sand.u32 %s316, 1
          %s1645 = smul.addr %s1644, 8
          %s1646 = scalar_lea.vmem [#allocation16], %s1645
          %1647 = dma.done %s1643, 128
        $region112: #{tpu_custom_call.1} parent=107 // pred_fallthru
          _
      $region108: #{tpu_custom_call.1} parent=5 // pred_fallthru
        _
    $region6: #{tpu_custom_call.1} parent=1 // loop_footer
      %s34 = sadd.s32 1, %s30
    $region7: #{tpu_custom_call.1} parent=1 // loop_footer_branch
      %29 = sbr.rel target = $region3
    $region8: #{tpu_custom_call.1} parent=1 // loop_exit
      _
    %1648 = vsyncpa [#allocation3], 1
    %s1649 = scalar_lea.sflag [#allocation3], 1
    %1650 = vsyncpa %s1649, 1
    %1651 = vsyncpa [#allocation6], 1
    %s1652 = scalar_lea.sflag [#allocation6], 1
    %1653 = vsyncpa %s1652, 1
    %1654 = vsyncpa [#allocation9], 1
    %1655 = vsyncpa [#allocation12], 1
    %1656 = vsyncpa [#allocation15], 1
    %1657 = vsyncpa [#allocation4], 1
    %s1658 = scalar_lea.sflag [#allocation4], 1
    %1659 = vsyncpa %s1658, 1

</llo_original>
